<compile_context>
chip_gen: v6e
topology: v6e:2x2x1
jax: 0.10.0
libtpu: 0.0.40
codegen_flags: <defaults>
</compile_context>

<pallas_src>
import functools

import jax
import jax.numpy as jnp
from jax.experimental import pallas as pl
from jax.experimental.pallas import tpu as pltpu

_LANE = 128      # lane width of a vreg / MXU alignment
_SUBLANE = 8     # f32 sublane count (bf16 packs 16)


def _round_up(n, m):
    return ((n + m - 1) // m) * m


def _mlp_kernel(x_ref,
                w1_ref, b1_ref,
                w2_ref, b2_ref,
                w3_ref, b3_ref,
                w4_ref, b4_ref,
                w5_ref, b5_ref,
                o_ref, *, compute_dtype):
    """One batch tile through all five linear layers + final ReLU."""

    def dense(h, w_ref, b_ref):
        # MXU matmul in compute_dtype (bf16 or f32 operands), f32 accumulation;
        # bias-add (and the final ReLU) stay f32 on the VPU.  Weights arrive
        # pre-cast, so only the activation cast is real work on the bf16 path.
        acc = jnp.dot(h.astype(compute_dtype), w_ref[...],
                      preferred_element_type=jnp.float32)
        return acc + b_ref[...]

    h = dense(x_ref[...], w1_ref, b1_ref)
    h = dense(h, w2_ref, b2_ref)
    h = dense(h, w3_ref, b3_ref)
    h = dense(h, w4_ref, b4_ref)
    h = dense(h, w5_ref, b5_ref)
    # activation_fn = F.relu, applied after the output layer (as in the module).
    o_ref[...] = jnp.maximum(h, 0.0).astype(o_ref.dtype)


def four_hidden_layer_mlp(x, params, *, block_m=512, use_bf16=True,
                          vmem_budget_bytes=44 << 20):
    """params: list of 5 (w, b) pairs; w: (in, out), b: (1, out) or (out,)."""
    batch, in_features = x.shape
    out_features = params[-1][0].shape[1]

    compute_dtype = jnp.bfloat16 if use_bf16 else jnp.float32
    x_dtype = jnp.bfloat16 if use_bf16 else jnp.float32

    # ---- Pad hidden/output feature dims to multiples of 128 (lane-dense matmuls and
    # an unmasked full-lane output store).  Layer-1 keeps K = in_features so x never
    # needs a feature-pad copy in HBM.  Zero padding is exact math.
    def _pad_params(wdtype):
        pp = []
        for li, (w, b) in enumerate(params):
            fi, fo = w.shape
            pfi = fi if li == 0 else _round_up(fi, _LANE)
            pfo = _round_up(fo, _LANE)
            wp = jnp.zeros((pfi, pfo), wdtype).at[:fi, :fo].set(w.astype(wdtype))
            bp = jnp.zeros((1, pfo), jnp.float32).at[:, :fo].set(
                jnp.reshape(b, (1, fo)).astype(jnp.float32))
            pp.append((wp, bp))
        return pp

    def _wb_bytes(pp):
        return sum(int(w.size) * w.dtype.itemsize + int(b.size) * b.dtype.itemsize
                   for w, b in pp)

    padded_params = _pad_params(compute_dtype)
    weights_bytes = _wb_bytes(padded_params)

    # ---- VMEM budget guard (v7x has only 64 MiB; keep resident weights well inside).
    if weights_bytes > vmem_budget_bytes and compute_dtype == jnp.float32:
        compute_dtype = jnp.bfloat16          # halve resident weight footprint
        padded_params = _pad_params(jnp.bfloat16)
        weights_bytes = _wb_bytes(padded_params)
    # TODO(synk): if bf16 weights still exceed the v7x budget, tile the weights over
    # an inner (K, N) grid axis instead of keeping them whole-array VMEM-resident.

    padded_out = padded_params[-1][0].shape[1]

    # ---- Batch handling: pad only to the sublane multiple and use a cdiv grid.
    sub = 16 if x_dtype == jnp.bfloat16 else _SUBLANE
    padded_batch = _round_up(batch, sub)

    tm = _round_up(max(block_m, sub), sub)
    tm = min(tm, padded_batch)
    # Guarantee >=2 grid steps when the batch allows it (v7x: two TensorCores can
    # shard the "parallel" batch axis; a single-step grid leaves one core idle).
    if padded_batch >= 2 * sub:
        tm = min(tm, _round_up(pl.cdiv(padded_batch, 2), sub))

    def _stream_bytes(tile_m):
        # double-buffered x tile + double-buffered out tile
        return 2 * tile_m * (in_features * jnp.dtype(x_dtype).itemsize + padded_out * 4)

    # Shrink tm if the streamed tiles + resident weights would overflow the budget.
    while tm > sub and weights_bytes + _stream_bytes(tm) > vmem_budget_bytes:
        tm = _round_up(max(tm // 2, sub), sub)

    grid_m = pl.cdiv(padded_batch, tm)

    # x: pad rows to the sublane multiple (tiny) and cast to the storage dtype; skip
    # the copy entirely when nothing changes.
    if padded_batch != batch or x.dtype != jnp.dtype(x_dtype):
        xp = jnp.zeros((padded_batch, in_features), x_dtype).at[:batch].set(
            x.astype(x_dtype))
    else:
        xp = x

    flat_args = [xp]
    for wp, bp in padded_params:
        flat_args.extend([wp, bp])

    flops = 2 * padded_batch * sum(int(w.shape[0]) * int(w.shape[1])
                                   for w, _ in padded_params)
    bytes_accessed = (int(xp.size) * xp.dtype.itemsize
                      + weights_bytes
                      + padded_batch * padded_out * 4)

    # Explicit scoped-VMEM limit: resident weights (x2 to also cover the
    # double-buffer fallback), streamed tiles, plus headroom for f32 intermediates.
    max_width = max(int(w.shape[1]) for w, _ in padded_params)
    scratch_margin = 4 * tm * max_width * 4
    vmem_needed = 2 * weights_bytes + _stream_bytes(tm) + scratch_margin
    vmem_limit = int(min(max(int(vmem_needed * 1.25) + (2 << 20), 32 << 20), 128 << 20))

    def _build(single_buffer_weights):
        in_specs = [pl.BlockSpec((tm, in_features), lambda i: (i, 0))]
        for wp, bp in padded_params:
            if single_buffer_weights:
                # Block-invariant (constant index_map) -> one buffer is enough;
                # default double-buffering would double the resident weight VMEM.
                in_specs.append(pl.BlockSpec(wp.shape, lambda i: (0, 0),
                                             pipeline_mode=pl.Buffered(1)))
                in_specs.append(pl.BlockSpec(bp.shape, lambda i: (0, 0),
                                             pipeline_mode=pl.Buffered(1)))
            else:
                in_specs.append(pl.BlockSpec(wp.shape, lambda i: (0, 0)))
                in_specs.append(pl.BlockSpec(bp.shape, lambda i: (0, 0)))
        return pl.pallas_call(
            functools.partial(_mlp_kernel, compute_dtype=compute_dtype),
            out_shape=jax.ShapeDtypeStruct((padded_batch, padded_out), jnp.float32),
            grid=(grid_m,),
            in_specs=in_specs,
            out_specs=pl.BlockSpec((tm, padded_out), lambda i: (i, 0)),
            compiler_params=pltpu.CompilerParams(
                dimension_semantics=("parallel",),
                vmem_limit_bytes=vmem_limit),
            cost_estimate=pl.CostEstimate(flops=flops, transcendentals=0,
                                          bytes_accessed=bytes_accessed),
        )

    try:
        out_padded = _build(True)(*flat_args)
    except Exception:
        # pipeline_mode / Buffered(1) not available on this jax version: fall back to
        # default double-buffering (functionally identical, just 2x weight VMEM).
        out_padded = _build(False)(*flat_args)

    return out_padded[:batch, :out_features]


def _init_linear(key, in_features, out_features):
    """Deterministic init matching nn.Linear default: U(-1/sqrt(in), 1/sqrt(in)).

    Returns w with shape (in, out) — transposed vs. PyTorch — and b (1, out).
    """
    kw, kb = jax.random.split(key)
    bound = 1.0 / jnp.sqrt(jnp.float32(in_features))
    w = jax.random.uniform(kw, (in_features, out_features), jnp.float32,
                           minval=-bound, maxval=bound)
    b = jax.random.uniform(kb, (1, out_features), jnp.float32,
                           minval=-bound, maxval=bound)
    return w, b


if __name__ == "__main__":
    # Small shapes consistent with the module:
    #   input_size  = number of (scaled) feature columns
    #   hidden_layer_sizes -> 4 hidden Linear layers
    #   output_size = number of unique class labels
    input_size = 12
    hidden_layer_sizes = [32, 32, 32, 32]
    output_size = 4

    key = jax.random.PRNGKey(0)
    keys = jax.random.split(key, 7)

    sizes = [input_size] + hidden_layer_sizes + [output_size]
    params = [_init_linear(keys[i], sizes[i], sizes[i + 1]) for i in range(5)]

    def ref_forward(xin):
        h = xin
        for w, b in params:
            h = h @ w + b
        return jnp.maximum(h, 0.0)

    # 1) Exact f32 path, tiny batch (grid collapses to a single program).
    x_small = jax.random.normal(keys[5], (8, input_size), jnp.float32)
    out_small = jax.block_until_ready(
        four_hidden_layer_mlp(x_small, params, use_bf16=False))
    assert out_small.shape == (8, output_size)
    assert jnp.allclose(out_small, ref_forward(x_small), atol=1e-5, rtol=1e-5)

    # 2) Exact f32 path, ragged batch: cdiv grid with 2 batch-parallel steps,
    #    weights whole-array VMEM-resident, 8-row-only batch pad.
    x_big = jax.random.normal(keys[6], (300, input_size), jnp.float32)
    out_big = jax.block_until_ready(
        four_hidden_layer_mlp(x_big, params, use_bf16=False))
    assert out_big.shape == (300, output_size)
    assert jnp.allclose(out_big, ref_forward(x_big), atol=1e-5, rtol=1e-5)

    # 3) Default path: bf16 MXU operands + bf16 x storage, f32 accumulate/bias/ReLU.
    out_bf16 = jax.block_until_ready(four_hidden_layer_mlp(x_big, params))
    assert out_bf16.shape == (300, output_size)
    assert jnp.allclose(out_bf16, ref_forward(x_big), atol=5e-2, rtol=5e-2)

    print("KERNEL_OK")
</pallas_src>

<mosaic_0001>
module attributes {stable_mosaic.version = 11 : i64} {
  func.func @_mlp_kernel(%arg0: i32, %arg1: memref<8x12xf32, #tpu.memory_space<vmem>>, %arg2: memref<12x128xf32, #tpu.memory_space<vmem>>, %arg3: memref<1x128xf32, #tpu.memory_space<vmem>>, %arg4: memref<128x128xf32, #tpu.memory_space<vmem>>, %arg5: memref<1x128xf32, #tpu.memory_space<vmem>>, %arg6: memref<128x128xf32, #tpu.memory_space<vmem>>, %arg7: memref<1x128xf32, #tpu.memory_space<vmem>>, %arg8: memref<128x128xf32, #tpu.memory_space<vmem>>, %arg9: memref<1x128xf32, #tpu.memory_space<vmem>>, %arg10: memref<128x128xf32, #tpu.memory_space<vmem>>, %arg11: memref<1x128xf32, #tpu.memory_space<vmem>>, %arg12: memref<8x128xf32, #tpu.memory_space<vmem>>) attributes {dimension_semantics = [#tpu.dimension_semantics<parallel>], iteration_bounds = array<i64: 1>, scalar_prefetch = 0 : i64, scratch_operands = 0 : i64, tpu.core_type = #tpu.core_type<tc>, window_params = [{transform_indices = @transform_0, window_bounds = array<i64: 8, 12>}, {pipeline_mode = #tpu.pipeline_mode<synchronous>, transform_indices = @transform_1, window_bounds = array<i64: 12, 128>}, {pipeline_mode = #tpu.pipeline_mode<synchronous>, transform_indices = @transform_2, window_bounds = array<i64: 1, 128>}, {pipeline_mode = #tpu.pipeline_mode<synchronous>, transform_indices = @transform_3, window_bounds = array<i64: 128, 128>}, {pipeline_mode = #tpu.pipeline_mode<synchronous>, transform_indices = @transform_4, window_bounds = array<i64: 1, 128>}, {pipeline_mode = #tpu.pipeline_mode<synchronous>, transform_indices = @transform_5, window_bounds = array<i64: 128, 128>}, {pipeline_mode = #tpu.pipeline_mode<synchronous>, transform_indices = @transform_6, window_bounds = array<i64: 1, 128>}, {pipeline_mode = #tpu.pipeline_mode<synchronous>, transform_indices = @transform_7, window_bounds = array<i64: 128, 128>}, {pipeline_mode = #tpu.pipeline_mode<synchronous>, transform_indices = @transform_8, window_bounds = array<i64: 1, 128>}, {pipeline_mode = #tpu.pipeline_mode<synchronous>, transform_indices = @transform_9, window_bounds = array<i64: 128, 128>}, {pipeline_mode = #tpu.pipeline_mode<synchronous>, transform_indices = @transform_10, window_bounds = array<i64: 1, 128>}, {transform_indices = @transform_11, window_bounds = array<i64: 8, 128>}]} {
    %c0 = arith.constant 0 : index
    %c0_0 = arith.constant 0 : index
    %0 = vector.load %arg1[%c0, %c0_0] : memref<8x12xf32, #tpu.memory_space<vmem>>, vector<8x12xf32>
    %c0_1 = arith.constant 0 : index
    %c0_2 = arith.constant 0 : index
    %1 = vector.load %arg2[%c0_1, %c0_2] : memref<12x128xf32, #tpu.memory_space<vmem>>, vector<12x128xf32>
    %cst = arith.constant dense<0.000000e+00> : vector<8x128xf32>
    %2 = tpu.matmul %0, %1, %cst {dimension_numbers = #tpu.dot_dimension_numbers<[1], [0], [0], [1], [0, 0, 1, 1], [], []>} : vector<8x12xf32>, vector<12x128xf32>, vector<8x128xf32> -> vector<8x128xf32>
    %c0_3 = arith.constant 0 : index
    %c0_4 = arith.constant 0 : index
    %3 = vector.load %arg3[%c0_3, %c0_4] : memref<1x128xf32, #tpu.memory_space<vmem>>, vector<1x128xf32>
    %4 = vector.broadcast %3 : vector<1x128xf32> to vector<8x128xf32>
    %5 = arith.addf %2, %4 : vector<8x128xf32>
    %c0_5 = arith.constant 0 : index
    %c0_6 = arith.constant 0 : index
    %6 = vector.load %arg4[%c0_5, %c0_6] : memref<128x128xf32, #tpu.memory_space<vmem>>, vector<128x128xf32>
    %cst_7 = arith.constant dense<0.000000e+00> : vector<8x128xf32>
    %7 = tpu.matmul %5, %6, %cst_7 {dimension_numbers = #tpu.dot_dimension_numbers<[1], [0], [0], [1], [0, 0, 1, 1], [], []>} : vector<8x128xf32>, vector<128x128xf32>, vector<8x128xf32> -> vector<8x128xf32>
    %c0_8 = arith.constant 0 : index
    %c0_9 = arith.constant 0 : index
    %8 = vector.load %arg5[%c0_8, %c0_9] : memref<1x128xf32, #tpu.memory_space<vmem>>, vector<1x128xf32>
    %9 = vector.broadcast %8 : vector<1x128xf32> to vector<8x128xf32>
    %10 = arith.addf %7, %9 : vector<8x128xf32>
    %c0_10 = arith.constant 0 : index
    %c0_11 = arith.constant 0 : index
    %11 = vector.load %arg6[%c0_10, %c0_11] : memref<128x128xf32, #tpu.memory_space<vmem>>, vector<128x128xf32>
    %cst_12 = arith.constant dense<0.000000e+00> : vector<8x128xf32>
    %12 = tpu.matmul %10, %11, %cst_12 {dimension_numbers = #tpu.dot_dimension_numbers<[1], [0], [0], [1], [0, 0, 1, 1], [], []>} : vector<8x128xf32>, vector<128x128xf32>, vector<8x128xf32> -> vector<8x128xf32>
    %c0_13 = arith.constant 0 : index
    %c0_14 = arith.constant 0 : index
    %13 = vector.load %arg7[%c0_13, %c0_14] : memref<1x128xf32, #tpu.memory_space<vmem>>, vector<1x128xf32>
    %14 = vector.broadcast %13 : vector<1x128xf32> to vector<8x128xf32>
    %15 = arith.addf %12, %14 : vector<8x128xf32>
    %c0_15 = arith.constant 0 : index
    %c0_16 = arith.constant 0 : index
    %16 = vector.load %arg8[%c0_15, %c0_16] : memref<128x128xf32, #tpu.memory_space<vmem>>, vector<128x128xf32>
    %cst_17 = arith.constant dense<0.000000e+00> : vector<8x128xf32>
    %17 = tpu.matmul %15, %16, %cst_17 {dimension_numbers = #tpu.dot_dimension_numbers<[1], [0], [0], [1], [0, 0, 1, 1], [], []>} : vector<8x128xf32>, vector<128x128xf32>, vector<8x128xf32> -> vector<8x128xf32>
    %c0_18 = arith.constant 0 : index
    %c0_19 = arith.constant 0 : index
    %18 = vector.load %arg9[%c0_18, %c0_19] : memref<1x128xf32, #tpu.memory_space<vmem>>, vector<1x128xf32>
    %19 = vector.broadcast %18 : vector<1x128xf32> to vector<8x128xf32>
    %20 = arith.addf %17, %19 : vector<8x128xf32>
    %c0_20 = arith.constant 0 : index
    %c0_21 = arith.constant 0 : index
    %21 = vector.load %arg10[%c0_20, %c0_21] : memref<128x128xf32, #tpu.memory_space<vmem>>, vector<128x128xf32>
    %cst_22 = arith.constant dense<0.000000e+00> : vector<8x128xf32>
    %22 = tpu.matmul %20, %21, %cst_22 {dimension_numbers = #tpu.dot_dimension_numbers<[1], [0], [0], [1], [0, 0, 1, 1], [], []>} : vector<8x128xf32>, vector<128x128xf32>, vector<8x128xf32> -> vector<8x128xf32>
    %c0_23 = arith.constant 0 : index
    %c0_24 = arith.constant 0 : index
    %23 = vector.load %arg11[%c0_23, %c0_24] : memref<1x128xf32, #tpu.memory_space<vmem>>, vector<1x128xf32>
    %24 = vector.broadcast %23 : vector<1x128xf32> to vector<8x128xf32>
    %25 = arith.addf %22, %24 : vector<8x128xf32>
    %cst_25 = arith.constant 0.000000e+00 : f32
    %26 = vector.broadcast %cst_25 : f32 to vector<8x128xf32>
    %27 = arith.maximumf %25, %26 : vector<8x128xf32>
    %c0_26 = arith.constant 0 : index
    %c0_27 = arith.constant 0 : index
    %28 = vector.load %arg12[%c0_26, %c0_27] : memref<8x128xf32, #tpu.memory_space<vmem>>, vector<8x128xf32>
    tpu.vector_store %arg12[%c0_26, %c0_27], %27 {strides = array<i32>} : memref<8x128xf32, #tpu.memory_space<vmem>>, vector<8x128xf32>,
    return
  }
  func.func @transform_0(%arg0: i32) -> (i32, i32) {
    %c0_i32 = arith.constant 0 : i32
    %c0_i32_0 = arith.constant 0 : i32
    return %arg0, %c0_i32 : i32, i32
  }
  func.func @transform_1(%arg0: i32) -> (i32, i32) {
    %c0_i32 = arith.constant 0 : i32
    %c0_i32_0 = arith.constant 0 : i32
    %c0_i32_1 = arith.constant 0 : i32
    return %c0_i32, %c0_i32_0 : i32, i32
  }
  func.func @transform_2(%arg0: i32) -> (i32, i32) {
    %c0_i32 = arith.constant 0 : i32
    %c0_i32_0 = arith.constant 0 : i32
    %c0_i32_1 = arith.constant 0 : i32
    return %c0_i32, %c0_i32_0 : i32, i32
  }
  func.func @transform_3(%arg0: i32) -> (i32, i32) {
    %c0_i32 = arith.constant 0 : i32
    %c0_i32_0 = arith.constant 0 : i32
    %c0_i32_1 = arith.constant 0 : i32
    return %c0_i32, %c0_i32_0 : i32, i32
  }
  func.func @transform_4(%arg0: i32) -> (i32, i32) {
    %c0_i32 = arith.constant 0 : i32
    %c0_i32_0 = arith.constant 0 : i32
    %c0_i32_1 = arith.constant 0 : i32
    return %c0_i32, %c0_i32_0 : i32, i32
  }
  func.func @transform_5(%arg0: i32) -> (i32, i32) {
    %c0_i32 = arith.constant 0 : i32
    %c0_i32_0 = arith.constant 0 : i32
    %c0_i32_1 = arith.constant 0 : i32
    return %c0_i32, %c0_i32_0 : i32, i32
  }
  func.func @transform_6(%arg0: i32) -> (i32, i32) {
    %c0_i32 = arith.constant 0 : i32
    %c0_i32_0 = arith.constant 0 : i32
    %c0_i32_1 = arith.constant 0 : i32
    return %c0_i32, %c0_i32_0 : i32, i32
  }
  func.func @transform_7(%arg0: i32) -> (i32, i32) {
    %c0_i32 = arith.constant 0 : i32
    %c0_i32_0 = arith.constant 0 : i32
    %c0_i32_1 = arith.constant 0 : i32
    return %c0_i32, %c0_i32_0 : i32, i32
  }
  func.func @transform_8(%arg0: i32) -> (i32, i32) {
    %c0_i32 = arith.constant 0 : i32
    %c0_i32_0 = arith.constant 0 : i32
    %c0_i32_1 = arith.constant 0 : i32
    return %c0_i32, %c0_i32_0 : i32, i32
  }
  func.func @transform_9(%arg0: i32) -> (i32, i32) {
    %c0_i32 = arith.constant 0 : i32
    %c0_i32_0 = arith.constant 0 : i32
    %c0_i32_1 = arith.constant 0 : i32
    return %c0_i32, %c0_i32_0 : i32, i32
  }
  func.func @transform_10(%arg0: i32) -> (i32, i32) {
    %c0_i32 = arith.constant 0 : i32
    %c0_i32_0 = arith.constant 0 : i32
    %c0_i32_1 = arith.constant 0 : i32
    return %c0_i32, %c0_i32_0 : i32, i32
  }
  func.func @transform_11(%arg0: i32) -> (i32, i32) {
    %c0_i32 = arith.constant 0 : i32
    %c0_i32_0 = arith.constant 0 : i32
    return %arg0, %c0_i32 : i32, i32
  }
}

module attributes {stable_mosaic.version = 11 : i64} {
  func.func @_mlp_kernel(%arg0: i32, %arg1: memref<8x12xf32, #tpu.memory_space<vmem>>, %arg2: memref<12x128xf32, #tpu.memory_space<vmem>>, %arg3: memref<1x128xf32, #tpu.memory_space<vmem>>, %arg4: memref<128x128xf32, #tpu.memory_space<vmem>>, %arg5: memref<1x128xf32, #tpu.memory_space<vmem>>, %arg6: memref<128x128xf32, #tpu.memory_space<vmem>>, %arg7: memref<1x128xf32, #tpu.memory_space<vmem>>, %arg8: memref<128x128xf32, #tpu.memory_space<vmem>>, %arg9: memref<1x128xf32, #tpu.memory_space<vmem>>, %arg10: memref<128x128xf32, #tpu.memory_space<vmem>>, %arg11: memref<1x128xf32, #tpu.memory_space<vmem>>, %arg12: memref<8x128xf32, #tpu.memory_space<vmem>>) attributes {dimension_semantics = [#tpu.dimension_semantics<parallel>], iteration_bounds = array<i64: 1>, scalar_prefetch = 0 : i64, scratch_operands = 0 : i64, tpu.core_type = #tpu.core_type<tc>, window_params = [{transform_indices = @transform_0, window_bounds = array<i64: 8, 12>}, {pipeline_mode = #tpu.pipeline_mode<synchronous>, transform_indices = @transform_1, window_bounds = array<i64: 12, 128>}, {pipeline_mode = #tpu.pipeline_mode<synchronous>, transform_indices = @transform_2, window_bounds = array<i64: 1, 128>}, {pipeline_mode = #tpu.pipeline_mode<synchronous>, transform_indices = @transform_3, window_bounds = array<i64: 128, 128>}, {pipeline_mode = #tpu.pipeline_mode<synchronous>, transform_indices = @transform_4, window_bounds = array<i64: 1, 128>}, {pipeline_mode = #tpu.pipeline_mode<synchronous>, transform_indices = @transform_5, window_bounds = array<i64: 128, 128>}, {pipeline_mode = #tpu.pipeline_mode<synchronous>, transform_indices = @transform_6, window_bounds = array<i64: 1, 128>}, {pipeline_mode = #tpu.pipeline_mode<synchronous>, transform_indices = @transform_7, window_bounds = array<i64: 128, 128>}, {pipeline_mode = #tpu.pipeline_mode<synchronous>, transform_indices = @transform_8, window_bounds = array<i64: 1, 128>}, {pipeline_mode = #tpu.pipeline_mode<synchronous>, transform_indices = @transform_9, window_bounds = array<i64: 128, 128>}, {pipeline_mode = #tpu.pipeline_mode<synchronous>, transform_indices = @transform_10, window_bounds = array<i64: 1, 128>}, {transform_indices = @transform_11, window_bounds = array<i64: 8, 128>}]} {
    %c0 = arith.constant 0 : index
    %c0_0 = arith.constant 0 : index
    %0 = vector.load %arg1[%c0, %c0_0] : memref<8x12xf32, #tpu.memory_space<vmem>>, vector<8x12xf32>
    %c0_1 = arith.constant 0 : index
    %c0_2 = arith.constant 0 : index
    %1 = vector.load %arg2[%c0_1, %c0_2] : memref<12x128xf32, #tpu.memory_space<vmem>>, vector<12x128xf32>
    %cst = arith.constant dense<0.000000e+00> : vector<8x128xf32>
    %2 = tpu.matmul %0, %1, %cst {dimension_numbers = #tpu.dot_dimension_numbers<[1], [0], [0], [1], [0, 0, 1, 1], [], []>} : vector<8x12xf32>, vector<12x128xf32>, vector<8x128xf32> -> vector<8x128xf32>
    %c0_3 = arith.constant 0 : index
    %c0_4 = arith.constant 0 : index
    %3 = vector.load %arg3[%c0_3, %c0_4] : memref<1x128xf32, #tpu.memory_space<vmem>>, vector<1x128xf32>
    %4 = vector.broadcast %3 : vector<1x128xf32> to vector<8x128xf32>
    %5 = arith.addf %2, %4 : vector<8x128xf32>
    %c0_5 = arith.constant 0 : index
    %c0_6 = arith.constant 0 : index
    %6 = vector.load %arg4[%c0_5, %c0_6] : memref<128x128xf32, #tpu.memory_space<vmem>>, vector<128x128xf32>
    %cst_7 = arith.constant dense<0.000000e+00> : vector<8x128xf32>
    %7 = tpu.matmul %5, %6, %cst_7 {dimension_numbers = #tpu.dot_dimension_numbers<[1], [0], [0], [1], [0, 0, 1, 1], [], []>} : vector<8x128xf32>, vector<128x128xf32>, vector<8x128xf32> -> vector<8x128xf32>
    %c0_8 = arith.constant 0 : index
    %c0_9 = arith.constant 0 : index
    %8 = vector.load %arg5[%c0_8, %c0_9] : memref<1x128xf32, #tpu.memory_space<vmem>>, vector<1x128xf32>
    %9 = vector.broadcast %8 : vector<1x128xf32> to vector<8x128xf32>
    %10 = arith.addf %7, %9 : vector<8x128xf32>
    %c0_10 = arith.constant 0 : index
    %c0_11 = arith.constant 0 : index
    %11 = vector.load %arg6[%c0_10, %c0_11] : memref<128x128xf32, #tpu.memory_space<vmem>>, vector<128x128xf32>
    %cst_12 = arith.constant dense<0.000000e+00> : vector<8x128xf32>
    %12 = tpu.matmul %10, %11, %cst_12 {dimension_numbers = #tpu.dot_dimension_numbers<[1], [0], [0], [1], [0, 0, 1, 1], [], []>} : vector<8x128xf32>, vector<128x128xf32>, vector<8x128xf32> -> vector<8x128xf32>
    %c0_13 = arith.constant 0 : index
    %c0_14 = arith.constant 0 : index
    %13 = vector.load %arg7[%c0_13, %c0_14] : memref<1x128xf32, #tpu.memory_space<vmem>>, vector<1x128xf32>
    %14 = vector.broadcast %13 : vector<1x128xf32> to vector<8x128xf32>
    %15 = arith.addf %12, %14 : vector<8x128xf32>
    %c0_15 = arith.constant 0 : index
    %c0_16 = arith.constant 0 : index
    %16 = vector.load %arg8[%c0_15, %c0_16] : memref<128x128xf32, #tpu.memory_space<vmem>>, vector<128x128xf32>
    %cst_17 = arith.constant dense<0.000000e+00> : vector<8x128xf32>
    %17 = tpu.matmul %15, %16, %cst_17 {dimension_numbers = #tpu.dot_dimension_numbers<[1], [0], [0], [1], [0, 0, 1, 1], [], []>} : vector<8x128xf32>, vector<128x128xf32>, vector<8x128xf32> -> vector<8x128xf32>
    %c0_18 = arith.constant 0 : index
    %c0_19 = arith.constant 0 : index
    %18 = vector.load %arg9[%c0_18, %c0_19] : memref<1x128xf32, #tpu.memory_space<vmem>>, vector<1x128xf32>
    %19 = vector.broadcast %18 : vector<1x128xf32> to vector<8x128xf32>
    %20 = arith.addf %17, %19 : vector<8x128xf32>
    %c0_20 = arith.constant 0 : index
    %c0_21 = arith.constant 0 : index
    %21 = vector.load %arg10[%c0_20, %c0_21] : memref<128x128xf32, #tpu.memory_space<vmem>>, vector<128x128xf32>
    %cst_22 = arith.constant dense<0.000000e+00> : vector<8x128xf32>
    %22 = tpu.matmul %20, %21, %cst_22 {dimension_numbers = #tpu.dot_dimension_numbers<[1], [0], [0], [1], [0, 0, 1, 1], [], []>} : vector<8x128xf32>, vector<128x128xf32>, vector<8x128xf32> -> vector<8x128xf32>
    %c0_23 = arith.constant 0 : index
    %c0_24 = arith.constant 0 : index
    %23 = vector.load %arg11[%c0_23, %c0_24] : memref<1x128xf32, #tpu.memory_space<vmem>>, vector<1x128xf32>
    %24 = vector.broadcast %23 : vector<1x128xf32> to vector<8x128xf32>
    %25 = arith.addf %22, %24 : vector<8x128xf32>
    %cst_25 = arith.constant 0.000000e+00 : f32
    %26 = vector.broadcast %cst_25 : f32 to vector<8x128xf32>
    %27 = arith.maximumf %25, %26 : vector<8x128xf32>
    %c0_26 = arith.constant 0 : index
    %c0_27 = arith.constant 0 : index
    %28 = vector.load %arg12[%c0_26, %c0_27] : memref<8x128xf32, #tpu.memory_space<vmem>>, vector<8x128xf32>
    tpu.vector_store %arg12[%c0_26, %c0_27], %27 {strides = array<i32>} : memref<8x128xf32, #tpu.memory_space<vmem>>, vector<8x128xf32>,
    return
  }
  func.func @transform_0(%arg0: i32) -> (i32, i32) {
    %c0_i32 = arith.constant 0 : i32
    %c0_i32_0 = arith.constant 0 : i32
    return %arg0, %c0_i32 : i32, i32
  }
  func.func @transform_1(%arg0: i32) -> (i32, i32) {
    %c0_i32 = arith.constant 0 : i32
    %c0_i32_0 = arith.constant 0 : i32
    %c0_i32_1 = arith.constant 0 : i32
    return %c0_i32, %c0_i32_0 : i32, i32
  }
  func.func @transform_2(%arg0: i32) -> (i32, i32) {
    %c0_i32 = arith.constant 0 : i32
    %c0_i32_0 = arith.constant 0 : i32
    %c0_i32_1 = arith.constant 0 : i32
    return %c0_i32, %c0_i32_0 : i32, i32
  }
  func.func @transform_3(%arg0: i32) -> (i32, i32) {
    %c0_i32 = arith.constant 0 : i32
    %c0_i32_0 = arith.constant 0 : i32
    %c0_i32_1 = arith.constant 0 : i32
    return %c0_i32, %c0_i32_0 : i32, i32
  }
  func.func @transform_4(%arg0: i32) -> (i32, i32) {
    %c0_i32 = arith.constant 0 : i32
    %c0_i32_0 = arith.constant 0 : i32
    %c0_i32_1 = arith.constant 0 : i32
    return %c0_i32, %c0_i32_0 : i32, i32
  }
  func.func @transform_5(%arg0: i32) -> (i32, i32) {
    %c0_i32 = arith.constant 0 : i32
    %c0_i32_0 = arith.constant 0 : i32
    %c0_i32_1 = arith.constant 0 : i32
    return %c0_i32, %c0_i32_0 : i32, i32
  }
  func.func @transform_6(%arg0: i32) -> (i32, i32) {
    %c0_i32 = arith.constant 0 : i32
    %c0_i32_0 = arith.constant 0 : i32
    %c0_i32_1 = arith.constant 0 : i32
    return %c0_i32, %c0_i32_0 : i32, i32
  }
  func.func @transform_7(%arg0: i32) -> (i32, i32) {
    %c0_i32 = arith.constant 0 : i32
    %c0_i32_0 = arith.constant 0 : i32
    %c0_i32_1 = arith.constant 0 : i32
    return %c0_i32, %c0_i32_0 : i32, i32
  }
  func.func @transform_8(%arg0: i32) -> (i32, i32) {
    %c0_i32 = arith.constant 0 : i32
    %c0_i32_0 = arith.constant 0 : i32
    %c0_i32_1 = arith.constant 0 : i32
    return %c0_i32, %c0_i32_0 : i32, i32
  }
  func.func @transform_9(%arg0: i32) -> (i32, i32) {
    %c0_i32 = arith.constant 0 : i32
    %c0_i32_0 = arith.constant 0 : i32
    %c0_i32_1 = arith.constant 0 : i32
    return %c0_i32, %c0_i32_0 : i32, i32
  }
  func.func @transform_10(%arg0: i32) -> (i32, i32) {
    %c0_i32 = arith.constant 0 : i32
    %c0_i32_0 = arith.constant 0 : i32
    %c0_i32_1 = arith.constant 0 : i32
    return %c0_i32, %c0_i32_0 : i32, i32
  }
  func.func @transform_11(%arg0: i32) -> (i32, i32) {
    %c0_i32 = arith.constant 0 : i32
    %c0_i32_0 = arith.constant 0 : i32
    return %arg0, %c0_i32 : i32, i32
  }
}

</mosaic_0001>

<llo_original>
// kernel: tpu_custom_call.1
$region0: #{tpu_custom_call.1}
  #allocation0 [shape = 'u32[]', space=smem, size = 0x4, offset = 0x4, fixed_abs, tag = 'smem constant byte address 0x4 - core index']
  #allocation1 [shape = 'u32[144,128]{1,0:T(1,128)}', space=vmem, size = 0x12000, scoped, tag = 'internal scratch']
  %s0 = inlined_call_operand.hbm [shape: f32[8,12], index: 0, kind: input, shape index: {}]
  %s1 = inlined_call_operand.hbm [shape: f32[12,128], index: 1, kind: input, shape index: {}]
  %s2 = inlined_call_operand.vmem [shape: f32[1,128], index: 2, kind: input, shape index: {}]
  %s3 = inlined_call_operand.hbm [shape: f32[128,128], index: 3, kind: input, shape index: {}]
  %s4 = inlined_call_operand.vmem [shape: f32[1,128], index: 4, kind: input, shape index: {}]
  %s5 = inlined_call_operand.hbm [shape: f32[128,128], index: 5, kind: input, shape index: {}]
  %s6 = inlined_call_operand.vmem [shape: f32[1,128], index: 6, kind: input, shape index: {}]
  %s7 = inlined_call_operand.hbm [shape: f32[128,128], index: 7, kind: input, shape index: {}]
  %s8 = inlined_call_operand.vmem [shape: f32[1,128], index: 8, kind: input, shape index: {}]
  %s9 = inlined_call_operand.hbm [shape: f32[128,128], index: 9, kind: input, shape index: {}]
  %s10 = inlined_call_operand.vmem [shape: f32[1,128], index: 10, kind: input, shape index: {}]
  %s11 = inlined_call_operand.hbm [shape: f32[8,128], index: 11, kind: output, shape index: {}]
  %s12 = sld [smem:[#allocation0]]
  $region78: #{tpu_custom_call.1} parent=0
    _
  %s14 = ssub.s32 1, %s12
  %s15 = scalar_select 0, %s14, %s12
  $region1: #{tpu_custom_call.1} parent=0
    #allocation2 [shape = 'u8[4096]{0}', space=vmem, size = 0x1000, scoped, tag = 'input window, operand 0, single buffered']
    #allocation3 [shape = 's32[1]{0}', space=sflag, size = 0x4, scoped, tag = 'scoped memory for tpu_custom_call.1']
    #allocation4 [shape = 's32[1]{0}', space=sflag, size = 0x4, scoped, tag = 'scoped memory for tpu_custom_call.1']
    #allocation5 [shape = 'u8[8192]{0}', space=vmem, size = 0x2000, scoped, tag = 'input window, operand 1, single buffered']
    #allocation6 [shape = 's32[1]{0}', space=sflag, size = 0x4, scoped, tag = 'scoped memory for tpu_custom_call.1']
    #allocation7 [shape = 'u8[65536]{0}', space=vmem, size = 0x10000, scoped, tag = 'input window, operand 3, single buffered']
    #allocation8 [shape = 'u8[65536]{0}', space=vmem, size = 0x10000, scoped, tag = 'input window, operand 5, single buffered']
    #allocation9 [shape = 's32[1]{0}', space=sflag, size = 0x4, scoped, tag = 'scoped memory for tpu_custom_call.1']
    #allocation10 [shape = 'u8[65536]{0}', space=vmem, size = 0x10000, scoped, tag = 'input window, operand 7, single buffered']
    #allocation11 [shape = 'u8[65536]{0}', space=vmem, size = 0x10000, scoped, tag = 'input window, operand 9, single buffered']
    #allocation12 [shape = 's32[1]{0}', space=sflag, size = 0x4, scoped, tag = 'scoped memory for tpu_custom_call.1']
    #allocation13 [shape = 'u8[4096]{0}', space=vmem, size = 0x1000, scoped, tag = 'output window, operand 0, single buffered']
    %16 = vsyncpa [#allocation3], 0
    %17 = vsyncpa [#allocation6], 0
    %18 = vsyncpa [#allocation9], 0
    %19 = vsyncpa [#allocation12], 0
    %20 = vsyncpa [#allocation4], 0
    // Predicated region
    $region2: #{tpu_custom_call.1} parent=1 // pred_check
      _
    $region3: #{tpu_custom_call.1} parent=1 // pred_check_branch
      %22 = sbr.rel (0) target = $region5
    $region4: #{tpu_custom_call.1} parent=1 // pred_region
      %s24 = ssub.s32 128, 128
      %25 = vsyncadd [#allocation3], %s24
      %s27 = sshll.u32 [#allocation2], 4
      %s28 = int_to_ptr.vmem [resolvable:$true] %s27
      %30 = dma.hbm_to_vmem [thread:$0]  %s0, 128, %s28, [#allocation3]
    $region5: #{tpu_custom_call.1} parent=1 // pred_fallthru
      _
    // Predicated region
    $region6: #{tpu_custom_call.1} parent=1 // pred_check
      _
    $region7: #{tpu_custom_call.1} parent=1 // pred_check_branch
      %32 = sbr.rel (0) target = $region9
    $region8: #{tpu_custom_call.1} parent=1 // pred_region
      %s34 = ssub.s32 256, 256
      %35 = vsyncadd [#allocation6], %s34
      %s36 = sshll.u32 [#allocation5], 4
      %s37 = int_to_ptr.vmem [resolvable:$true] %s36
      %42 = dma.hbm_to_vmem [thread:$0]  %s1, 256, %s37, [#allocation6], 128, 128, 8
    $region9: #{tpu_custom_call.1} parent=1 // pred_fallthru
      _
    // Predicated region
    $region10: #{tpu_custom_call.1} parent=1 // pred_check
      _
    $region11: #{tpu_custom_call.1} parent=1 // pred_check_branch
      %44 = sbr.rel (0) target = $region13
    $region12: #{tpu_custom_call.1} parent=1 // pred_region
      _
    $region13: #{tpu_custom_call.1} parent=1 // pred_fallthru
      _
    // Predicated region
    $region14: #{tpu_custom_call.1} parent=1 // pred_check
      _
    $region15: #{tpu_custom_call.1} parent=1 // pred_check_branch
      %46 = sbr.rel (0) target = $region17
    $region16: #{tpu_custom_call.1} parent=1 // pred_region
      %s48 = ssub.s32 2048, 2048
      %49 = vsyncadd [#allocation6], %s48
      %s50 = sshll.u32 [#allocation7], 4
      %s51 = int_to_ptr.vmem [resolvable:$true] %s50
      %56 = dma.hbm_to_vmem [thread:$0]  %s3, 2048, %s51, [#allocation6], 128, 128, 8
    $region17: #{tpu_custom_call.1} parent=1 // pred_fallthru
      _
    // Predicated region
    $region18: #{tpu_custom_call.1} parent=1 // pred_check
      _
    $region19: #{tpu_custom_call.1} parent=1 // pred_check_branch
      %58 = sbr.rel (0) target = $region21
    $region20: #{tpu_custom_call.1} parent=1 // pred_region
      _
    $region21: #{tpu_custom_call.1} parent=1 // pred_fallthru
      _
    // Predicated region
    $region22: #{tpu_custom_call.1} parent=1 // pred_check
      _
    $region23: #{tpu_custom_call.1} parent=1 // pred_check_branch
      %60 = sbr.rel (0) target = $region25
    $region24: #{tpu_custom_call.1} parent=1 // pred_region
      %s62 = ssub.s32 2048, 2048
      %63 = vsyncadd [#allocation9], %s62
      %s64 = sshll.u32 [#allocation8], 4
      %s65 = int_to_ptr.vmem [resolvable:$true] %s64
      %70 = dma.hbm_to_vmem [thread:$0]  %s5, 2048, %s65, [#allocation9], 128, 128, 8
    $region25: #{tpu_custom_call.1} parent=1 // pred_fallthru
      _
    // Predicated region
    $region26: #{tpu_custom_call.1} parent=1 // pred_check
      _
    $region27: #{tpu_custom_call.1} parent=1 // pred_check_branch
      %72 = sbr.rel (0) target = $region29
    $region28: #{tpu_custom_call.1} parent=1 // pred_region
      _
    $region29: #{tpu_custom_call.1} parent=1 // pred_fallthru
      _
    // Predicated region
    $region30: #{tpu_custom_call.1} parent=1 // pred_check
      _
    $region31: #{tpu_custom_call.1} parent=1 // pred_check_branch
      %74 = sbr.rel (0) target = $region33
    $region32: #{tpu_custom_call.1} parent=1 // pred_region
      %s76 = ssub.s32 2048, 2048
      %77 = vsyncadd [#allocation9], %s76
      %s78 = sshll.u32 [#allocation10], 4
      %s79 = int_to_ptr.vmem [resolvable:$true] %s78
      %84 = dma.hbm_to_vmem [thread:$0]  %s7, 2048, %s79, [#allocation9], 128, 128, 8
    $region33: #{tpu_custom_call.1} parent=1 // pred_fallthru
      _
    // Predicated region
    $region34: #{tpu_custom_call.1} parent=1 // pred_check
      _
    $region35: #{tpu_custom_call.1} parent=1 // pred_check_branch
      %86 = sbr.rel (0) target = $region37
    $region36: #{tpu_custom_call.1} parent=1 // pred_region
      _
    $region37: #{tpu_custom_call.1} parent=1 // pred_fallthru
      _
    // Predicated region
    $region38: #{tpu_custom_call.1} parent=1 // pred_check
      _
    $region39: #{tpu_custom_call.1} parent=1 // pred_check_branch
      %88 = sbr.rel (0) target = $region41
    $region40: #{tpu_custom_call.1} parent=1 // pred_region
      %s90 = ssub.s32 2048, 2048
      %91 = vsyncadd [#allocation12], %s90
      %s92 = sshll.u32 [#allocation11], 4
      %s93 = int_to_ptr.vmem [resolvable:$true] %s92
      %98 = dma.hbm_to_vmem [thread:$0]  %s9, 2048, %s93, [#allocation12], 128, 128, 8
    $region41: #{tpu_custom_call.1} parent=1 // pred_fallthru
      _
    // Predicated region
    $region42: #{tpu_custom_call.1} parent=1 // pred_check
      _
    $region43: #{tpu_custom_call.1} parent=1 // pred_check_branch
      %100 = sbr.rel (0) target = $region45
    $region44: #{tpu_custom_call.1} parent=1 // pred_region
      _
    $region45: #{tpu_custom_call.1} parent=1 // pred_fallthru
      _
    // Predicated region
    $region46: #{tpu_custom_call.1} parent=1 // pred_check
      _
    $region47: #{tpu_custom_call.1} parent=1 // pred_check_branch
      %102 = sbr.rel (0) target = $region49
    $region48: #{tpu_custom_call.1} parent=1 // pred_region
      %103 = dma.done [#allocation3], 128
    $region49: #{tpu_custom_call.1} parent=1 // pred_fallthru
      _
    // Predicated region
    $region50: #{tpu_custom_call.1} parent=1 // pred_check
      _
    $region51: #{tpu_custom_call.1} parent=1 // pred_check_branch
      %105 = sbr.rel (0) target = $region53
    $region52: #{tpu_custom_call.1} parent=1 // pred_region
      %106 = dma.done [#allocation6], 256
    $region53: #{tpu_custom_call.1} parent=1 // pred_fallthru
      _
    // Predicated region
    $region54: #{tpu_custom_call.1} parent=1 // pred_check
      _
    $region55: #{tpu_custom_call.1} parent=1 // pred_check_branch
      %108 = sbr.rel (0) target = $region57
    $region56: #{tpu_custom_call.1} parent=1 // pred_region
      %109 = dma.done [#allocation6], 2048
    $region57: #{tpu_custom_call.1} parent=1 // pred_fallthru
      _
    // Predicated region
    $region58: #{tpu_custom_call.1} parent=1 // pred_check
      _
    $region59: #{tpu_custom_call.1} parent=1 // pred_check_branch
      %111 = sbr.rel (0) target = $region61
    $region60: #{tpu_custom_call.1} parent=1 // pred_region
      %112 = dma.done [#allocation9], 2048
    $region61: #{tpu_custom_call.1} parent=1 // pred_fallthru
      _
    // Predicated region
    $region62: #{tpu_custom_call.1} parent=1 // pred_check
      _
    $region63: #{tpu_custom_call.1} parent=1 // pred_check_branch
      %114 = sbr.rel (0) target = $region65
    $region64: #{tpu_custom_call.1} parent=1 // pred_region
      %115 = dma.done [#allocation9], 2048
    $region65: #{tpu_custom_call.1} parent=1 // pred_fallthru
      _
    // Predicated region
    $region66: #{tpu_custom_call.1} parent=1 // pred_check
      _
    $region67: #{tpu_custom_call.1} parent=1 // pred_check_branch
      %117 = sbr.rel (0) target = $region69
    $region68: #{tpu_custom_call.1} parent=1 // pred_region
      %118 = dma.done [#allocation12], 2048
    $region69: #{tpu_custom_call.1} parent=1 // pred_fallthru
      _
    %v119 = vld [vmem:[#allocation2] sm:$0xff]
    %v120 = vld [vmem:[#allocation5] sm:$0xff]
    %v121 = vld [vmem:[#allocation5 + $0x8] sm:$0xf]
    %v122 = vld [vmem:[%s2] sm:$0x1]
    %v124 = vlaneseq
    %v125 = vshrl.u32 %v124, 7
    %v126 = vsub.s32 0, %v125
    %v127 = vrot.slane %v122, %v126
    %vm129 = vcmask 97280
    %v131 = vsel %vm129, %v119, 0
    %vm133 = vcmask 1043456
    %v135 = vsel %vm133, %v121, 0
    %137 = vmatprep.subr.mxu0 0.0
    %138 = vmatpush1.msra.mxu0 0.0
    %139 = vmatprep.subr.mxu0 0.0
    %140 = vmatpush1.msra.mxu0 0.0
    %141 = vmatprep.subr.mxu0 0.0
    %142 = vmatpush1.msra.mxu0 0.0
    %143 = vmatprep.subr.mxu0 0.0
    %144 = vmatpush1.msra.mxu0 0.0
    %145 = vmatprep.subr.mxu0 0.0
    %146 = vmatpush1.msra.mxu0 0.0
    %147 = vmatprep.subr.mxu0 0.0
    %148 = vmatpush1.msra.mxu0 0.0
    %149 = vmatprep.subr.mxu0 0.0
    %150 = vmatpush1.msra.mxu0 0.0
    %151 = vmatprep.subr.mxu0 0.0
    %152 = vmatpush1.msra.mxu0 0.0
    %153 = vmatprep.subr.mxu0 0.0
    %154 = vmatpush1.msra.mxu0 0.0
    %155 = vmatprep.subr.mxu0 0.0
    %156 = vmatpush1.msra.mxu0 0.0
    %157 = vmatprep.subr.mxu0 0.0
    %158 = vmatpush1.msra.mxu0 0.0
    %159 = vmatprep.subr.mxu0 0.0
    %160 = vmatpush1.msra.mxu0 0.0
    %161 = vmatprep.subr.mxu0 0.0
    %162 = vmatpush1.msra.mxu0 0.0
    %163 = vmatprep.subr.mxu0 0.0
    %164 = vmatpush1.msra.mxu0 0.0
    %165 = vmatprep.subr.mxu0 0.0
    %166 = vmatpush1.msra.mxu0 %v135
    %167 = vmatprep.subr.mxu0 0.0
    %168 = vmatpush1.msra.mxu0 %v120
    %169 = vmatprep.subr.mxu0 0.0
    %170 = vmatpush2.msra.mxu0 0.0
    %171 = vmatprep.subr.mxu0 0.0
    %172 = vmatpush2.msra.mxu0 0.0
    %173 = vmatprep.subr.mxu0 0.0
    %174 = vmatpush2.msra.mxu0 0.0
    %175 = vmatprep.subr.mxu0 0.0
    %176 = vmatpush2.msra.mxu0 0.0
    %177 = vmatprep.subr.mxu0 0.0
    %178 = vmatpush2.msra.mxu0 0.0
    %179 = vmatprep.subr.mxu0 0.0
    %180 = vmatpush2.msra.mxu0 0.0
    %181 = vmatprep.subr.mxu0 0.0
    %182 = vmatpush2.msra.mxu0 0.0
    %183 = vmatprep.subr.mxu0 0.0
    %184 = vmatpush2.msra.mxu0 0.0
    %185 = vmatprep.subr.mxu0 0.0
    %186 = vmatpush2.msra.mxu0 0.0
    %187 = vmatprep.subr.mxu0 0.0
    %188 = vmatpush2.msra.mxu0 0.0
    %189 = vmatprep.subr.mxu0 0.0
    %190 = vmatpush2.msra.mxu0 0.0
    %191 = vmatprep.subr.mxu0 0.0
    %192 = vmatpush2.msra.mxu0 0.0
    %193 = vmatprep.subr.mxu0 0.0
    %194 = vmatpush2.msra.mxu0 0.0
    %195 = vmatprep.subr.mxu0 0.0
    %196 = vmatpush2.msra.mxu0 0.0
    %197 = vmatprep.subr.mxu0 0.0
    %198 = vmatpush2.msra.mxu0 0.0
    %199 = vmatprep.subr.mxu0 0.0
    %200 = vmatpush2.msra.mxu0 0.0
    %201 = vmatprep.mubr.f32.mxu0 0.0
    %202 = vmatmul.mubr.f32.gmra.mxu0 %v131
    %v203 = vpop.f32.mrf.mxu0
    %v204 = vadd.f32 %v127, %v203
    %v205 = vpop.f32.mrf.mxu0
    %206 = vdwg.mxu0
    %v207 = vld [vmem:[#allocation7] sm:$0xff]
    %v208 = vld [vmem:[#allocation7 + $0x8] sm:$0xff]
    %v209 = vld [vmem:[#allocation7 + $0x10] sm:$0xff]
    %v210 = vld [vmem:[#allocation7 + $0x18] sm:$0xff]
    %v211 = vld [vmem:[#allocation7 + $0x20] sm:$0xff]
    %v212 = vld [vmem:[#allocation7 + $0x28] sm:$0xff]
    %v213 = vld [vmem:[#allocation7 + $0x30] sm:$0xff]
    %v214 = vld [vmem:[#allocation7 + $0x38] sm:$0xff]
    %v215 = vld [vmem:[#allocation7 + $0x40] sm:$0xff]
    %v216 = vld [vmem:[#allocation7 + $0x48] sm:$0xff]
    %v217 = vld [vmem:[#allocation7 + $0x50] sm:$0xff]
    %v218 = vld [vmem:[#allocation7 + $0x58] sm:$0xff]
    %v219 = vld [vmem:[#allocation7 + $0x60] sm:$0xff]
    %v220 = vld [vmem:[#allocation7 + $0x68] sm:$0xff]
    %v221 = vld [vmem:[#allocation7 + $0x70] sm:$0xff]
    %v222 = vld [vmem:[#allocation7 + $0x78] sm:$0xff]
    %v223 = vld [vmem:[%s4] sm:$0x1]
    %v225 = vlaneseq
    %v226 = vshrl.u32 %v225, 7
    %v227 = vsub.s32 0, %v226
    %v228 = vrot.slane %v223, %v227
    %230 = vmatprep.subr.mxu0 0.0
    %231 = vmatpush1.msra.mxu0 %v222
    %232 = vmatprep.subr.mxu0 0.0
    %233 = vmatpush1.msra.mxu0 %v221
    %234 = vmatprep.subr.mxu0 0.0
    %235 = vmatpush1.msra.mxu0 %v220
    %236 = vmatprep.subr.mxu0 0.0
    %237 = vmatpush1.msra.mxu0 %v219
    %238 = vmatprep.subr.mxu0 0.0
    %239 = vmatpush1.msra.mxu0 %v218
    %240 = vmatprep.subr.mxu0 0.0
    %241 = vmatpush1.msra.mxu0 %v217
    %242 = vmatprep.subr.mxu0 0.0
    %243 = vmatpush1.msra.mxu0 %v216
    %244 = vmatprep.subr.mxu0 0.0
    %245 = vmatpush1.msra.mxu0 %v215
    %246 = vmatprep.subr.mxu0 0.0
    %247 = vmatpush1.msra.mxu0 %v214
    %248 = vmatprep.subr.mxu0 0.0
    %249 = vmatpush1.msra.mxu0 %v213
    %250 = vmatprep.subr.mxu0 0.0
    %251 = vmatpush1.msra.mxu0 %v212
    %252 = vmatprep.subr.mxu0 0.0
    %253 = vmatpush1.msra.mxu0 %v211
    %254 = vmatprep.subr.mxu0 0.0
    %255 = vmatpush1.msra.mxu0 %v210
    %256 = vmatprep.subr.mxu0 0.0
    %257 = vmatpush1.msra.mxu0 %v209
    %258 = vmatprep.subr.mxu0 0.0
    %259 = vmatpush1.msra.mxu0 %v208
    %260 = vmatprep.subr.mxu0 0.0
    %261 = vmatpush1.msra.mxu0 %v207
    %262 = vmatprep.subr.mxu0 0.0
    %263 = vmatpush2.msra.mxu0 0.0
    %264 = vmatprep.subr.mxu0 0.0
    %265 = vmatpush2.msra.mxu0 0.0
    %266 = vmatprep.subr.mxu0 0.0
    %267 = vmatpush2.msra.mxu0 0.0
    %268 = vmatprep.subr.mxu0 0.0
    %269 = vmatpush2.msra.mxu0 0.0
    %270 = vmatprep.subr.mxu0 0.0
    %271 = vmatpush2.msra.mxu0 0.0
    %272 = vmatprep.subr.mxu0 0.0
    %273 = vmatpush2.msra.mxu0 0.0
    %274 = vmatprep.subr.mxu0 0.0
    %275 = vmatpush2.msra.mxu0 0.0
    %276 = vmatprep.subr.mxu0 0.0
    %277 = vmatpush2.msra.mxu0 0.0
    %278 = vmatprep.subr.mxu0 0.0
    %279 = vmatpush2.msra.mxu0 0.0
    %280 = vmatprep.subr.mxu0 0.0
    %281 = vmatpush2.msra.mxu0 0.0
    %282 = vmatprep.subr.mxu0 0.0
    %283 = vmatpush2.msra.mxu0 0.0
    %284 = vmatprep.subr.mxu0 0.0
    %285 = vmatpush2.msra.mxu0 0.0
    %286 = vmatprep.subr.mxu0 0.0
    %287 = vmatpush2.msra.mxu0 0.0
    %288 = vmatprep.subr.mxu0 0.0
    %289 = vmatpush2.msra.mxu0 0.0
    %290 = vmatprep.subr.mxu0 0.0
    %291 = vmatpush2.msra.mxu0 0.0
    %292 = vmatprep.subr.mxu0 0.0
    %293 = vmatpush2.msra.mxu0 0.0
    %294 = vmatprep.mubr.f32.mxu0 0.0
    %295 = vmatmul.mubr.f32.gmra.mxu0 %v204
    %v296 = vpop.f32.mrf.mxu0
    %v297 = vadd.f32 %v228, %v296
    %v298 = vpop.f32.mrf.mxu0
    %299 = vdwg.mxu0
    %v300 = vld [vmem:[#allocation8] sm:$0xff]
    %v301 = vld [vmem:[#allocation8 + $0x8] sm:$0xff]
    %v302 = vld [vmem:[#allocation8 + $0x10] sm:$0xff]
    %v303 = vld [vmem:[#allocation8 + $0x18] sm:$0xff]
    %v304 = vld [vmem:[#allocation8 + $0x20] sm:$0xff]
    %v305 = vld [vmem:[#allocation8 + $0x28] sm:$0xff]
    %v306 = vld [vmem:[#allocation8 + $0x30] sm:$0xff]
    %v307 = vld [vmem:[#allocation8 + $0x38] sm:$0xff]
    %v308 = vld [vmem:[#allocation8 + $0x40] sm:$0xff]
    %v309 = vld [vmem:[#allocation8 + $0x48] sm:$0xff]
    %v310 = vld [vmem:[#allocation8 + $0x50] sm:$0xff]
    %v311 = vld [vmem:[#allocation8 + $0x58] sm:$0xff]
    %v312 = vld [vmem:[#allocation8 + $0x60] sm:$0xff]
    %v313 = vld [vmem:[#allocation8 + $0x68] sm:$0xff]
    %v314 = vld [vmem:[#allocation8 + $0x70] sm:$0xff]
    %v315 = vld [vmem:[#allocation8 + $0x78] sm:$0xff]
    %v316 = vld [vmem:[%s6] sm:$0x1]
    %v318 = vlaneseq
    %v319 = vshrl.u32 %v318, 7
    %v320 = vsub.s32 0, %v319
    %v321 = vrot.slane %v316, %v320
    %323 = vmatprep.subr.mxu0 0.0
    %324 = vmatpush1.msra.mxu0 %v315
    %325 = vmatprep.subr.mxu0 0.0
    %326 = vmatpush1.msra.mxu0 %v314
    %327 = vmatprep.subr.mxu0 0.0
    %328 = vmatpush1.msra.mxu0 %v313
    %329 = vmatprep.subr.mxu0 0.0
    %330 = vmatpush1.msra.mxu0 %v312
    %331 = vmatprep.subr.mxu0 0.0
    %332 = vmatpush1.msra.mxu0 %v311
    %333 = vmatprep.subr.mxu0 0.0
    %334 = vmatpush1.msra.mxu0 %v310
    %335 = vmatprep.subr.mxu0 0.0
    %336 = vmatpush1.msra.mxu0 %v309
    %337 = vmatprep.subr.mxu0 0.0
    %338 = vmatpush1.msra.mxu0 %v308
    %339 = vmatprep.subr.mxu0 0.0
    %340 = vmatpush1.msra.mxu0 %v307
    %341 = vmatprep.subr.mxu0 0.0
    %342 = vmatpush1.msra.mxu0 %v306
    %343 = vmatprep.subr.mxu0 0.0
    %344 = vmatpush1.msra.mxu0 %v305
    %345 = vmatprep.subr.mxu0 0.0
    %346 = vmatpush1.msra.mxu0 %v304
    %347 = vmatprep.subr.mxu0 0.0
    %348 = vmatpush1.msra.mxu0 %v303
    %349 = vmatprep.subr.mxu0 0.0
    %350 = vmatpush1.msra.mxu0 %v302
    %351 = vmatprep.subr.mxu0 0.0
    %352 = vmatpush1.msra.mxu0 %v301
    %353 = vmatprep.subr.mxu0 0.0
    %354 = vmatpush1.msra.mxu0 %v300
    %355 = vmatprep.subr.mxu0 0.0
    %356 = vmatpush2.msra.mxu0 0.0
    %357 = vmatprep.subr.mxu0 0.0
    %358 = vmatpush2.msra.mxu0 0.0
    %359 = vmatprep.subr.mxu0 0.0
    %360 = vmatpush2.msra.mxu0 0.0
    %361 = vmatprep.subr.mxu0 0.0
    %362 = vmatpush2.msra.mxu0 0.0
    %363 = vmatprep.subr.mxu0 0.0
    %364 = vmatpush2.msra.mxu0 0.0
    %365 = vmatprep.subr.mxu0 0.0
    %366 = vmatpush2.msra.mxu0 0.0
    %367 = vmatprep.subr.mxu0 0.0
    %368 = vmatpush2.msra.mxu0 0.0
    %369 = vmatprep.subr.mxu0 0.0
    %370 = vmatpush2.msra.mxu0 0.0
    %371 = vmatprep.subr.mxu0 0.0
    %372 = vmatpush2.msra.mxu0 0.0
    %373 = vmatprep.subr.mxu0 0.0
    %374 = vmatpush2.msra.mxu0 0.0
    %375 = vmatprep.subr.mxu0 0.0
    %376 = vmatpush2.msra.mxu0 0.0
    %377 = vmatprep.subr.mxu0 0.0
    %378 = vmatpush2.msra.mxu0 0.0
    %379 = vmatprep.subr.mxu0 0.0
    %380 = vmatpush2.msra.mxu0 0.0
    %381 = vmatprep.subr.mxu0 0.0
    %382 = vmatpush2.msra.mxu0 0.0
    %383 = vmatprep.subr.mxu0 0.0
    %384 = vmatpush2.msra.mxu0 0.0
    %385 = vmatprep.subr.mxu0 0.0
    %386 = vmatpush2.msra.mxu0 0.0
    %387 = vmatprep.mubr.f32.mxu0 0.0
    %388 = vmatmul.mubr.f32.gmra.mxu0 %v297
    %v389 = vpop.f32.mrf.mxu0
    %v390 = vadd.f32 %v321, %v389
    %v391 = vpop.f32.mrf.mxu0
    %392 = vdwg.mxu0
    %v393 = vld [vmem:[#allocation10] sm:$0xff]
    %v394 = vld [vmem:[#allocation10 + $0x8] sm:$0xff]
    %v395 = vld [vmem:[#allocation10 + $0x10] sm:$0xff]
    %v396 = vld [vmem:[#allocation10 + $0x18] sm:$0xff]
    %v397 = vld [vmem:[#allocation10 + $0x20] sm:$0xff]
    %v398 = vld [vmem:[#allocation10 + $0x28] sm:$0xff]
    %v399 = vld [vmem:[#allocation10 + $0x30] sm:$0xff]
    %v400 = vld [vmem:[#allocation10 + $0x38] sm:$0xff]
    %v401 = vld [vmem:[#allocation10 + $0x40] sm:$0xff]
    %v402 = vld [vmem:[#allocation10 + $0x48] sm:$0xff]
    %v403 = vld [vmem:[#allocation10 + $0x50] sm:$0xff]
    %v404 = vld [vmem:[#allocation10 + $0x58] sm:$0xff]
    %v405 = vld [vmem:[#allocation10 + $0x60] sm:$0xff]
    %v406 = vld [vmem:[#allocation10 + $0x68] sm:$0xff]
    %v407 = vld [vmem:[#allocation10 + $0x70] sm:$0xff]
    %v408 = vld [vmem:[#allocation10 + $0x78] sm:$0xff]
    %v409 = vld [vmem:[%s8] sm:$0x1]
    %v411 = vlaneseq
    %v412 = vshrl.u32 %v411, 7
    %v413 = vsub.s32 0, %v412
    %v414 = vrot.slane %v409, %v413
    %416 = vmatprep.subr.mxu0 0.0
    %417 = vmatpush1.msra.mxu0 %v408
    %418 = vmatprep.subr.mxu0 0.0
    %419 = vmatpush1.msra.mxu0 %v407
    %420 = vmatprep.subr.mxu0 0.0
    %421 = vmatpush1.msra.mxu0 %v406
    %422 = vmatprep.subr.mxu0 0.0
    %423 = vmatpush1.msra.mxu0 %v405
    %424 = vmatprep.subr.mxu0 0.0
    %425 = vmatpush1.msra.mxu0 %v404
    %426 = vmatprep.subr.mxu0 0.0
    %427 = vmatpush1.msra.mxu0 %v403
    %428 = vmatprep.subr.mxu0 0.0
    %429 = vmatpush1.msra.mxu0 %v402
    %430 = vmatprep.subr.mxu0 0.0
    %431 = vmatpush1.msra.mxu0 %v401
    %432 = vmatprep.subr.mxu0 0.0
    %433 = vmatpush1.msra.mxu0 %v400
    %434 = vmatprep.subr.mxu0 0.0
    %435 = vmatpush1.msra.mxu0 %v399
    %436 = vmatprep.subr.mxu0 0.0
    %437 = vmatpush1.msra.mxu0 %v398
    %438 = vmatprep.subr.mxu0 0.0
    %439 = vmatpush1.msra.mxu0 %v397
    %440 = vmatprep.subr.mxu0 0.0
    %441 = vmatpush1.msra.mxu0 %v396
    %442 = vmatprep.subr.mxu0 0.0
    %443 = vmatpush1.msra.mxu0 %v395
    %444 = vmatprep.subr.mxu0 0.0
    %445 = vmatpush1.msra.mxu0 %v394
    %446 = vmatprep.subr.mxu0 0.0
    %447 = vmatpush1.msra.mxu0 %v393
    %448 = vmatprep.subr.mxu0 0.0
    %449 = vmatpush2.msra.mxu0 0.0
    %450 = vmatprep.subr.mxu0 0.0
    %451 = vmatpush2.msra.mxu0 0.0
    %452 = vmatprep.subr.mxu0 0.0
    %453 = vmatpush2.msra.mxu0 0.0
    %454 = vmatprep.subr.mxu0 0.0
    %455 = vmatpush2.msra.mxu0 0.0
    %456 = vmatprep.subr.mxu0 0.0
    %457 = vmatpush2.msra.mxu0 0.0
    %458 = vmatprep.subr.mxu0 0.0
    %459 = vmatpush2.msra.mxu0 0.0
    %460 = vmatprep.subr.mxu0 0.0
    %461 = vmatpush2.msra.mxu0 0.0
    %462 = vmatprep.subr.mxu0 0.0
    %463 = vmatpush2.msra.mxu0 0.0
    %464 = vmatprep.subr.mxu0 0.0
    %465 = vmatpush2.msra.mxu0 0.0
    %466 = vmatprep.subr.mxu0 0.0
    %467 = vmatpush2.msra.mxu0 0.0
    %468 = vmatprep.subr.mxu0 0.0
    %469 = vmatpush2.msra.mxu0 0.0
    %470 = vmatprep.subr.mxu0 0.0
    %471 = vmatpush2.msra.mxu0 0.0
    %472 = vmatprep.subr.mxu0 0.0
    %473 = vmatpush2.msra.mxu0 0.0
    %474 = vmatprep.subr.mxu0 0.0
    %475 = vmatpush2.msra.mxu0 0.0
    %476 = vmatprep.subr.mxu0 0.0
    %477 = vmatpush2.msra.mxu0 0.0
    %478 = vmatprep.subr.mxu0 0.0
    %479 = vmatpush2.msra.mxu0 0.0
    %480 = vmatprep.mubr.f32.mxu0 0.0
    %481 = vmatmul.mubr.f32.gmra.mxu0 %v390
    %v482 = vpop.f32.mrf.mxu0
    %v483 = vadd.f32 %v414, %v482
    %v484 = vpop.f32.mrf.mxu0
    %485 = vdwg.mxu0
    %v486 = vld [vmem:[#allocation11] sm:$0xff]
    %v487 = vld [vmem:[#allocation11 + $0x8] sm:$0xff]
    %v488 = vld [vmem:[#allocation11 + $0x10] sm:$0xff]
    %v489 = vld [vmem:[#allocation11 + $0x18] sm:$0xff]
    %v490 = vld [vmem:[#allocation11 + $0x20] sm:$0xff]
    %v491 = vld [vmem:[#allocation11 + $0x28] sm:$0xff]
    %v492 = vld [vmem:[#allocation11 + $0x30] sm:$0xff]
    %v493 = vld [vmem:[#allocation11 + $0x38] sm:$0xff]
    %v494 = vld [vmem:[#allocation11 + $0x40] sm:$0xff]
    %v495 = vld [vmem:[#allocation11 + $0x48] sm:$0xff]
    %v496 = vld [vmem:[#allocation11 + $0x50] sm:$0xff]
    %v497 = vld [vmem:[#allocation11 + $0x58] sm:$0xff]
    %v498 = vld [vmem:[#allocation11 + $0x60] sm:$0xff]
    %v499 = vld [vmem:[#allocation11 + $0x68] sm:$0xff]
    %v500 = vld [vmem:[#allocation11 + $0x70] sm:$0xff]
    %v501 = vld [vmem:[#allocation11 + $0x78] sm:$0xff]
    %v502 = vld [vmem:[%s10] sm:$0x1]
    %v504 = vlaneseq
    %v505 = vshrl.u32 %v504, 7
    %v506 = vsub.s32 0, %v505
    %v507 = vrot.slane %v502, %v506
    %509 = vmatprep.subr.mxu0 0.0
    %510 = vmatpush1.msra.mxu0 %v501
    %511 = vmatprep.subr.mxu0 0.0
    %512 = vmatpush1.msra.mxu0 %v500
    %513 = vmatprep.subr.mxu0 0.0
    %514 = vmatpush1.msra.mxu0 %v499
    %515 = vmatprep.subr.mxu0 0.0
    %516 = vmatpush1.msra.mxu0 %v498
    %517 = vmatprep.subr.mxu0 0.0
    %518 = vmatpush1.msra.mxu0 %v497
    %519 = vmatprep.subr.mxu0 0.0
    %520 = vmatpush1.msra.mxu0 %v496
    %521 = vmatprep.subr.mxu0 0.0
    %522 = vmatpush1.msra.mxu0 %v495
    %523 = vmatprep.subr.mxu0 0.0
    %524 = vmatpush1.msra.mxu0 %v494
    %525 = vmatprep.subr.mxu0 0.0
    %526 = vmatpush1.msra.mxu0 %v493
    %527 = vmatprep.subr.mxu0 0.0
    %528 = vmatpush1.msra.mxu0 %v492
    %529 = vmatprep.subr.mxu0 0.0
    %530 = vmatpush1.msra.mxu0 %v491
    %531 = vmatprep.subr.mxu0 0.0
    %532 = vmatpush1.msra.mxu0 %v490
    %533 = vmatprep.subr.mxu0 0.0
    %534 = vmatpush1.msra.mxu0 %v489
    %535 = vmatprep.subr.mxu0 0.0
    %536 = vmatpush1.msra.mxu0 %v488
    %537 = vmatprep.subr.mxu0 0.0
    %538 = vmatpush1.msra.mxu0 %v487
    %539 = vmatprep.subr.mxu0 0.0
    %540 = vmatpush1.msra.mxu0 %v486
    %541 = vmatprep.subr.mxu0 0.0
    %542 = vmatpush2.msra.mxu0 0.0
    %543 = vmatprep.subr.mxu0 0.0
    %544 = vmatpush2.msra.mxu0 0.0
    %545 = vmatprep.subr.mxu0 0.0
    %546 = vmatpush2.msra.mxu0 0.0
    %547 = vmatprep.subr.mxu0 0.0
    %548 = vmatpush2.msra.mxu0 0.0
    %549 = vmatprep.subr.mxu0 0.0
    %550 = vmatpush2.msra.mxu0 0.0
    %551 = vmatprep.subr.mxu0 0.0
    %552 = vmatpush2.msra.mxu0 0.0
    %553 = vmatprep.subr.mxu0 0.0
    %554 = vmatpush2.msra.mxu0 0.0
    %555 = vmatprep.subr.mxu0 0.0
    %556 = vmatpush2.msra.mxu0 0.0
    %557 = vmatprep.subr.mxu0 0.0
    %558 = vmatpush2.msra.mxu0 0.0
    %559 = vmatprep.subr.mxu0 0.0
    %560 = vmatpush2.msra.mxu0 0.0
    %561 = vmatprep.subr.mxu0 0.0
    %562 = vmatpush2.msra.mxu0 0.0
    %563 = vmatprep.subr.mxu0 0.0
    %564 = vmatpush2.msra.mxu0 0.0
    %565 = vmatprep.subr.mxu0 0.0
    %566 = vmatpush2.msra.mxu0 0.0
    %567 = vmatprep.subr.mxu0 0.0
    %568 = vmatpush2.msra.mxu0 0.0
    %569 = vmatprep.subr.mxu0 0.0
    %570 = vmatpush2.msra.mxu0 0.0
    %571 = vmatprep.subr.mxu0 0.0
    %572 = vmatpush2.msra.mxu0 0.0
    %573 = vmatprep.mubr.f32.mxu0 0.0
    %574 = vmatmul.mubr.f32.gmra.mxu0 %v483
    %v575 = vpop.f32.mrf.mxu0
    %v576 = vadd.f32 %v507, %v575
    %v577 = vpop.f32.mrf.mxu0
    %578 = vdwg.mxu0
    %v579 = vmax.f32 %v576, 0.0
    %580 = vst [vmem:[#allocation13] sm:$0xff] %v579
    // Predicated region
    $region70: #{tpu_custom_call.1} parent=1 // pred_check
      _
    $region71: #{tpu_custom_call.1} parent=1 // pred_check_branch
      %582 = sbr.rel (0) target = $region73
    $region72: #{tpu_custom_call.1} parent=1 // pred_region
      %s584 = ssub.s32 128, 128
      %585 = vsyncadd [#allocation4], %s584
      %s587 = sshll.u32 [#allocation13], 4
      %s588 = int_to_ptr.vmem [resolvable:$true] %s587
      %590 = dma.vmem_to_hbm [thread:$0]  %s588, 128, %s11, [#allocation4]
    $region73: #{tpu_custom_call.1} parent=1 // pred_fallthru
      _
    // Predicated region
    $region74: #{tpu_custom_call.1} parent=1 // pred_check
      _
    $region75: #{tpu_custom_call.1} parent=1 // pred_check_branch
      %592 = sbr.rel (0) target = $region77
    $region76: #{tpu_custom_call.1} parent=1 // pred_region
      %593 = dma.done [#allocation4], 128
    $region77: #{tpu_custom_call.1} parent=1 // pred_fallthru
      _
    %594 = vsyncpa [#allocation3], 1
    %595 = vsyncpa [#allocation6], 1
    %596 = vsyncpa [#allocation9], 1
    %597 = vsyncpa [#allocation12], 1
    %598 = vsyncpa [#allocation4], 1

// kernel: tpu_custom_call.1
$region0: #{tpu_custom_call.1}
  #allocation0 [shape = 'u32[]', space=smem, size = 0x4, offset = 0x4, fixed_abs, tag = 'smem constant byte address 0x4 - core index']
  #allocation1 [shape = 'u32[144,128]{1,0:T(1,128)}', space=vmem, size = 0x12000, scoped, tag = 'internal scratch']
  %s0 = inlined_call_operand.hbm [shape: f32[8,12], index: 0, kind: input, shape index: {}]
  %s1 = inlined_call_operand.hbm [shape: f32[12,128], index: 1, kind: input, shape index: {}]
  %s2 = inlined_call_operand.vmem [shape: f32[1,128], index: 2, kind: input, shape index: {}]
  %s3 = inlined_call_operand.hbm [shape: f32[128,128], index: 3, kind: input, shape index: {}]
  %s4 = inlined_call_operand.vmem [shape: f32[1,128], index: 4, kind: input, shape index: {}]
  %s5 = inlined_call_operand.hbm [shape: f32[128,128], index: 5, kind: input, shape index: {}]
  %s6 = inlined_call_operand.vmem [shape: f32[1,128], index: 6, kind: input, shape index: {}]
  %s7 = inlined_call_operand.hbm [shape: f32[128,128], index: 7, kind: input, shape index: {}]
  %s8 = inlined_call_operand.vmem [shape: f32[1,128], index: 8, kind: input, shape index: {}]
  %s9 = inlined_call_operand.hbm [shape: f32[128,128], index: 9, kind: input, shape index: {}]
  %s10 = inlined_call_operand.vmem [shape: f32[1,128], index: 10, kind: input, shape index: {}]
  %s11 = inlined_call_operand.hbm [shape: f32[8,128], index: 11, kind: output, shape index: {}]
  %s12 = sld [smem:[#allocation0]]
  $region78: #{tpu_custom_call.1} parent=0
    _
  %s14 = ssub.s32 1, %s12
  %s15 = scalar_select 0, %s14, %s12
  $region1: #{tpu_custom_call.1} parent=0
    #allocation2 [shape = 'u8[4096]{0}', space=vmem, size = 0x1000, scoped, tag = 'input window, operand 0, single buffered']
    #allocation3 [shape = 's32[1]{0}', space=sflag, size = 0x4, scoped, tag = 'scoped memory for tpu_custom_call.1']
    #allocation4 [shape = 's32[1]{0}', space=sflag, size = 0x4, scoped, tag = 'scoped memory for tpu_custom_call.1']
    #allocation5 [shape = 'u8[8192]{0}', space=vmem, size = 0x2000, scoped, tag = 'input window, operand 1, single buffered']
    #allocation6 [shape = 's32[1]{0}', space=sflag, size = 0x4, scoped, tag = 'scoped memory for tpu_custom_call.1']
    #allocation7 [shape = 'u8[65536]{0}', space=vmem, size = 0x10000, scoped, tag = 'input window, operand 3, single buffered']
    #allocation8 [shape = 'u8[65536]{0}', space=vmem, size = 0x10000, scoped, tag = 'input window, operand 5, single buffered']
    #allocation9 [shape = 's32[1]{0}', space=sflag, size = 0x4, scoped, tag = 'scoped memory for tpu_custom_call.1']
    #allocation10 [shape = 'u8[65536]{0}', space=vmem, size = 0x10000, scoped, tag = 'input window, operand 7, single buffered']
    #allocation11 [shape = 'u8[65536]{0}', space=vmem, size = 0x10000, scoped, tag = 'input window, operand 9, single buffered']
    #allocation12 [shape = 's32[1]{0}', space=sflag, size = 0x4, scoped, tag = 'scoped memory for tpu_custom_call.1']
    #allocation13 [shape = 'u8[4096]{0}', space=vmem, size = 0x1000, scoped, tag = 'output window, operand 0, single buffered']
    %16 = vsyncpa [#allocation3], 0
    %17 = vsyncpa [#allocation6], 0
    %18 = vsyncpa [#allocation9], 0
    %19 = vsyncpa [#allocation12], 0
    %20 = vsyncpa [#allocation4], 0
    // Predicated region
    $region2: #{tpu_custom_call.1} parent=1 // pred_check
      _
    $region3: #{tpu_custom_call.1} parent=1 // pred_check_branch
      %22 = sbr.rel (0) target = $region5
    $region4: #{tpu_custom_call.1} parent=1 // pred_region
      %s24 = ssub.s32 128, 128
      %25 = vsyncadd [#allocation3], %s24
      %s27 = sshll.u32 [#allocation2], 4
      %s28 = int_to_ptr.vmem [resolvable:$true] %s27
      %30 = dma.hbm_to_vmem [thread:$0]  %s0, 128, %s28, [#allocation3]
    $region5: #{tpu_custom_call.1} parent=1 // pred_fallthru
      _
    // Predicated region
    $region6: #{tpu_custom_call.1} parent=1 // pred_check
      _
    $region7: #{tpu_custom_call.1} parent=1 // pred_check_branch
      %32 = sbr.rel (0) target = $region9
    $region8: #{tpu_custom_call.1} parent=1 // pred_region
      %s34 = ssub.s32 256, 256
      %35 = vsyncadd [#allocation6], %s34
      %s36 = sshll.u32 [#allocation5], 4
      %s37 = int_to_ptr.vmem [resolvable:$true] %s36
      %42 = dma.hbm_to_vmem [thread:$0]  %s1, 256, %s37, [#allocation6], 128, 128, 8
    $region9: #{tpu_custom_call.1} parent=1 // pred_fallthru
      _
    // Predicated region
    $region10: #{tpu_custom_call.1} parent=1 // pred_check
      _
    $region11: #{tpu_custom_call.1} parent=1 // pred_check_branch
      %44 = sbr.rel (0) target = $region13
    $region12: #{tpu_custom_call.1} parent=1 // pred_region
      _
    $region13: #{tpu_custom_call.1} parent=1 // pred_fallthru
      _
    // Predicated region
    $region14: #{tpu_custom_call.1} parent=1 // pred_check
      _
    $region15: #{tpu_custom_call.1} parent=1 // pred_check_branch
      %46 = sbr.rel (0) target = $region17
    $region16: #{tpu_custom_call.1} parent=1 // pred_region
      %s48 = ssub.s32 2048, 2048
      %49 = vsyncadd [#allocation6], %s48
      %s50 = sshll.u32 [#allocation7], 4
      %s51 = int_to_ptr.vmem [resolvable:$true] %s50
      %56 = dma.hbm_to_vmem [thread:$0]  %s3, 2048, %s51, [#allocation6], 128, 128, 8
    $region17: #{tpu_custom_call.1} parent=1 // pred_fallthru
      _
    // Predicated region
    $region18: #{tpu_custom_call.1} parent=1 // pred_check
      _
    $region19: #{tpu_custom_call.1} parent=1 // pred_check_branch
      %58 = sbr.rel (0) target = $region21
    $region20: #{tpu_custom_call.1} parent=1 // pred_region
      _
    $region21: #{tpu_custom_call.1} parent=1 // pred_fallthru
      _
    // Predicated region
    $region22: #{tpu_custom_call.1} parent=1 // pred_check
      _
    $region23: #{tpu_custom_call.1} parent=1 // pred_check_branch
      %60 = sbr.rel (0) target = $region25
    $region24: #{tpu_custom_call.1} parent=1 // pred_region
      %s62 = ssub.s32 2048, 2048
      %63 = vsyncadd [#allocation9], %s62
      %s64 = sshll.u32 [#allocation8], 4
      %s65 = int_to_ptr.vmem [resolvable:$true] %s64
      %70 = dma.hbm_to_vmem [thread:$0]  %s5, 2048, %s65, [#allocation9], 128, 128, 8
    $region25: #{tpu_custom_call.1} parent=1 // pred_fallthru
      _
    // Predicated region
    $region26: #{tpu_custom_call.1} parent=1 // pred_check
      _
    $region27: #{tpu_custom_call.1} parent=1 // pred_check_branch
      %72 = sbr.rel (0) target = $region29
    $region28: #{tpu_custom_call.1} parent=1 // pred_region
      _
    $region29: #{tpu_custom_call.1} parent=1 // pred_fallthru
      _
    // Predicated region
    $region30: #{tpu_custom_call.1} parent=1 // pred_check
      _
    $region31: #{tpu_custom_call.1} parent=1 // pred_check_branch
      %74 = sbr.rel (0) target = $region33
    $region32: #{tpu_custom_call.1} parent=1 // pred_region
      %s76 = ssub.s32 2048, 2048
      %77 = vsyncadd [#allocation9], %s76
      %s78 = sshll.u32 [#allocation10], 4
      %s79 = int_to_ptr.vmem [resolvable:$true] %s78
      %84 = dma.hbm_to_vmem [thread:$0]  %s7, 2048, %s79, [#allocation9], 128, 128, 8
    $region33: #{tpu_custom_call.1} parent=1 // pred_fallthru
      _
    // Predicated region
    $region34: #{tpu_custom_call.1} parent=1 // pred_check
      _
    $region35: #{tpu_custom_call.1} parent=1 // pred_check_branch
      %86 = sbr.rel (0) target = $region37
    $region36: #{tpu_custom_call.1} parent=1 // pred_region
      _
    $region37: #{tpu_custom_call.1} parent=1 // pred_fallthru
      _
    // Predicated region
    $region38: #{tpu_custom_call.1} parent=1 // pred_check
      _
    $region39: #{tpu_custom_call.1} parent=1 // pred_check_branch
      %88 = sbr.rel (0) target = $region41
    $region40: #{tpu_custom_call.1} parent=1 // pred_region
      %s90 = ssub.s32 2048, 2048
      %91 = vsyncadd [#allocation12], %s90
      %s92 = sshll.u32 [#allocation11], 4
      %s93 = int_to_ptr.vmem [resolvable:$true] %s92
      %98 = dma.hbm_to_vmem [thread:$0]  %s9, 2048, %s93, [#allocation12], 128, 128, 8
    $region41: #{tpu_custom_call.1} parent=1 // pred_fallthru
      _
    // Predicated region
    $region42: #{tpu_custom_call.1} parent=1 // pred_check
      _
    $region43: #{tpu_custom_call.1} parent=1 // pred_check_branch
      %100 = sbr.rel (0) target = $region45
    $region44: #{tpu_custom_call.1} parent=1 // pred_region
      _
    $region45: #{tpu_custom_call.1} parent=1 // pred_fallthru
      _
    // Predicated region
    $region46: #{tpu_custom_call.1} parent=1 // pred_check
      _
    $region47: #{tpu_custom_call.1} parent=1 // pred_check_branch
      %102 = sbr.rel (0) target = $region49
    $region48: #{tpu_custom_call.1} parent=1 // pred_region
      %103 = dma.done [#allocation3], 128
    $region49: #{tpu_custom_call.1} parent=1 // pred_fallthru
      _
    // Predicated region
    $region50: #{tpu_custom_call.1} parent=1 // pred_check
      _
    $region51: #{tpu_custom_call.1} parent=1 // pred_check_branch
      %105 = sbr.rel (0) target = $region53
    $region52: #{tpu_custom_call.1} parent=1 // pred_region
      %106 = dma.done [#allocation6], 256
    $region53: #{tpu_custom_call.1} parent=1 // pred_fallthru
      _
    // Predicated region
    $region54: #{tpu_custom_call.1} parent=1 // pred_check
      _
    $region55: #{tpu_custom_call.1} parent=1 // pred_check_branch
      %108 = sbr.rel (0) target = $region57
    $region56: #{tpu_custom_call.1} parent=1 // pred_region
      %109 = dma.done [#allocation6], 2048
    $region57: #{tpu_custom_call.1} parent=1 // pred_fallthru
      _
    // Predicated region
    $region58: #{tpu_custom_call.1} parent=1 // pred_check
      _
    $region59: #{tpu_custom_call.1} parent=1 // pred_check_branch
      %111 = sbr.rel (0) target = $region61
    $region60: #{tpu_custom_call.1} parent=1 // pred_region
      %112 = dma.done [#allocation9], 2048
    $region61: #{tpu_custom_call.1} parent=1 // pred_fallthru
      _
    // Predicated region
    $region62: #{tpu_custom_call.1} parent=1 // pred_check
      _
    $region63: #{tpu_custom_call.1} parent=1 // pred_check_branch
      %114 = sbr.rel (0) target = $region65
    $region64: #{tpu_custom_call.1} parent=1 // pred_region
      %115 = dma.done [#allocation9], 2048
    $region65: #{tpu_custom_call.1} parent=1 // pred_fallthru
      _
    // Predicated region
    $region66: #{tpu_custom_call.1} parent=1 // pred_check
      _
    $region67: #{tpu_custom_call.1} parent=1 // pred_check_branch
      %117 = sbr.rel (0) target = $region69
    $region68: #{tpu_custom_call.1} parent=1 // pred_region
      %118 = dma.done [#allocation12], 2048
    $region69: #{tpu_custom_call.1} parent=1 // pred_fallthru
      _
    %v119 = vld [vmem:[#allocation2] sm:$0xff]
    %v120 = vld [vmem:[#allocation5] sm:$0xff]
    %v121 = vld [vmem:[#allocation5 + $0x8] sm:$0xf]
    %v122 = vld [vmem:[%s2] sm:$0x1]
    %v124 = vlaneseq
    %v125 = vshrl.u32 %v124, 7
    %v126 = vsub.s32 0, %v125
    %v127 = vrot.slane %v122, %v126
    %vm129 = vcmask 97280
    %v131 = vsel %vm129, %v119, 0
    %vm133 = vcmask 1043456
    %v135 = vsel %vm133, %v121, 0
    %137 = vmatprep.subr.mxu0 0.0
    %138 = vmatpush1.msra.mxu0 0.0
    %139 = vmatprep.subr.mxu0 0.0
    %140 = vmatpush1.msra.mxu0 0.0
    %141 = vmatprep.subr.mxu0 0.0
    %142 = vmatpush1.msra.mxu0 0.0
    %143 = vmatprep.subr.mxu0 0.0
    %144 = vmatpush1.msra.mxu0 0.0
    %145 = vmatprep.subr.mxu0 0.0
    %146 = vmatpush1.msra.mxu0 0.0
    %147 = vmatprep.subr.mxu0 0.0
    %148 = vmatpush1.msra.mxu0 0.0
    %149 = vmatprep.subr.mxu0 0.0
    %150 = vmatpush1.msra.mxu0 0.0
    %151 = vmatprep.subr.mxu0 0.0
    %152 = vmatpush1.msra.mxu0 0.0
    %153 = vmatprep.subr.mxu0 0.0
    %154 = vmatpush1.msra.mxu0 0.0
    %155 = vmatprep.subr.mxu0 0.0
    %156 = vmatpush1.msra.mxu0 0.0
    %157 = vmatprep.subr.mxu0 0.0
    %158 = vmatpush1.msra.mxu0 0.0
    %159 = vmatprep.subr.mxu0 0.0
    %160 = vmatpush1.msra.mxu0 0.0
    %161 = vmatprep.subr.mxu0 0.0
    %162 = vmatpush1.msra.mxu0 0.0
    %163 = vmatprep.subr.mxu0 0.0
    %164 = vmatpush1.msra.mxu0 0.0
    %165 = vmatprep.subr.mxu0 0.0
    %166 = vmatpush1.msra.mxu0 %v135
    %167 = vmatprep.subr.mxu0 0.0
    %168 = vmatpush1.msra.mxu0 %v120
    %169 = vmatprep.subr.mxu0 0.0
    %170 = vmatpush2.msra.mxu0 0.0
    %171 = vmatprep.subr.mxu0 0.0
    %172 = vmatpush2.msra.mxu0 0.0
    %173 = vmatprep.subr.mxu0 0.0
    %174 = vmatpush2.msra.mxu0 0.0
    %175 = vmatprep.subr.mxu0 0.0
    %176 = vmatpush2.msra.mxu0 0.0
    %177 = vmatprep.subr.mxu0 0.0
    %178 = vmatpush2.msra.mxu0 0.0
    %179 = vmatprep.subr.mxu0 0.0
    %180 = vmatpush2.msra.mxu0 0.0
    %181 = vmatprep.subr.mxu0 0.0
    %182 = vmatpush2.msra.mxu0 0.0
    %183 = vmatprep.subr.mxu0 0.0
    %184 = vmatpush2.msra.mxu0 0.0
    %185 = vmatprep.subr.mxu0 0.0
    %186 = vmatpush2.msra.mxu0 0.0
    %187 = vmatprep.subr.mxu0 0.0
    %188 = vmatpush2.msra.mxu0 0.0
    %189 = vmatprep.subr.mxu0 0.0
    %190 = vmatpush2.msra.mxu0 0.0
    %191 = vmatprep.subr.mxu0 0.0
    %192 = vmatpush2.msra.mxu0 0.0
    %193 = vmatprep.subr.mxu0 0.0
    %194 = vmatpush2.msra.mxu0 0.0
    %195 = vmatprep.subr.mxu0 0.0
    %196 = vmatpush2.msra.mxu0 0.0
    %197 = vmatprep.subr.mxu0 0.0
    %198 = vmatpush2.msra.mxu0 0.0
    %199 = vmatprep.subr.mxu0 0.0
    %200 = vmatpush2.msra.mxu0 0.0
    %201 = vmatprep.mubr.f32.mxu0 0.0
    %202 = vmatmul.mubr.f32.gmra.mxu0 %v131
    %v203 = vpop.f32.mrf.mxu0
    %v204 = vadd.f32 %v127, %v203
    %v205 = vpop.f32.mrf.mxu0
    %206 = vdwg.mxu0
    %v207 = vld [vmem:[#allocation7] sm:$0xff]
    %v208 = vld [vmem:[#allocation7 + $0x8] sm:$0xff]
    %v209 = vld [vmem:[#allocation7 + $0x10] sm:$0xff]
    %v210 = vld [vmem:[#allocation7 + $0x18] sm:$0xff]
    %v211 = vld [vmem:[#allocation7 + $0x20] sm:$0xff]
    %v212 = vld [vmem:[#allocation7 + $0x28] sm:$0xff]
    %v213 = vld [vmem:[#allocation7 + $0x30] sm:$0xff]
    %v214 = vld [vmem:[#allocation7 + $0x38] sm:$0xff]
    %v215 = vld [vmem:[#allocation7 + $0x40] sm:$0xff]
    %v216 = vld [vmem:[#allocation7 + $0x48] sm:$0xff]
    %v217 = vld [vmem:[#allocation7 + $0x50] sm:$0xff]
    %v218 = vld [vmem:[#allocation7 + $0x58] sm:$0xff]
    %v219 = vld [vmem:[#allocation7 + $0x60] sm:$0xff]
    %v220 = vld [vmem:[#allocation7 + $0x68] sm:$0xff]
    %v221 = vld [vmem:[#allocation7 + $0x70] sm:$0xff]
    %v222 = vld [vmem:[#allocation7 + $0x78] sm:$0xff]
    %v223 = vld [vmem:[%s4] sm:$0x1]
    %v225 = vlaneseq
    %v226 = vshrl.u32 %v225, 7
    %v227 = vsub.s32 0, %v226
    %v228 = vrot.slane %v223, %v227
    %230 = vmatprep.subr.mxu0 0.0
    %231 = vmatpush1.msra.mxu0 %v222
    %232 = vmatprep.subr.mxu0 0.0
    %233 = vmatpush1.msra.mxu0 %v221
    %234 = vmatprep.subr.mxu0 0.0
    %235 = vmatpush1.msra.mxu0 %v220
    %236 = vmatprep.subr.mxu0 0.0
    %237 = vmatpush1.msra.mxu0 %v219
    %238 = vmatprep.subr.mxu0 0.0
    %239 = vmatpush1.msra.mxu0 %v218
    %240 = vmatprep.subr.mxu0 0.0
    %241 = vmatpush1.msra.mxu0 %v217
    %242 = vmatprep.subr.mxu0 0.0
    %243 = vmatpush1.msra.mxu0 %v216
    %244 = vmatprep.subr.mxu0 0.0
    %245 = vmatpush1.msra.mxu0 %v215
    %246 = vmatprep.subr.mxu0 0.0
    %247 = vmatpush1.msra.mxu0 %v214
    %248 = vmatprep.subr.mxu0 0.0
    %249 = vmatpush1.msra.mxu0 %v213
    %250 = vmatprep.subr.mxu0 0.0
    %251 = vmatpush1.msra.mxu0 %v212
    %252 = vmatprep.subr.mxu0 0.0
    %253 = vmatpush1.msra.mxu0 %v211
    %254 = vmatprep.subr.mxu0 0.0
    %255 = vmatpush1.msra.mxu0 %v210
    %256 = vmatprep.subr.mxu0 0.0
    %257 = vmatpush1.msra.mxu0 %v209
    %258 = vmatprep.subr.mxu0 0.0
    %259 = vmatpush1.msra.mxu0 %v208
    %260 = vmatprep.subr.mxu0 0.0
    %261 = vmatpush1.msra.mxu0 %v207
    %262 = vmatprep.subr.mxu0 0.0
    %263 = vmatpush2.msra.mxu0 0.0
    %264 = vmatprep.subr.mxu0 0.0
    %265 = vmatpush2.msra.mxu0 0.0
    %266 = vmatprep.subr.mxu0 0.0
    %267 = vmatpush2.msra.mxu0 0.0
    %268 = vmatprep.subr.mxu0 0.0
    %269 = vmatpush2.msra.mxu0 0.0
    %270 = vmatprep.subr.mxu0 0.0
    %271 = vmatpush2.msra.mxu0 0.0
    %272 = vmatprep.subr.mxu0 0.0
    %273 = vmatpush2.msra.mxu0 0.0
    %274 = vmatprep.subr.mxu0 0.0
    %275 = vmatpush2.msra.mxu0 0.0
    %276 = vmatprep.subr.mxu0 0.0
    %277 = vmatpush2.msra.mxu0 0.0
    %278 = vmatprep.subr.mxu0 0.0
    %279 = vmatpush2.msra.mxu0 0.0
    %280 = vmatprep.subr.mxu0 0.0
    %281 = vmatpush2.msra.mxu0 0.0
    %282 = vmatprep.subr.mxu0 0.0
    %283 = vmatpush2.msra.mxu0 0.0
    %284 = vmatprep.subr.mxu0 0.0
    %285 = vmatpush2.msra.mxu0 0.0
    %286 = vmatprep.subr.mxu0 0.0
    %287 = vmatpush2.msra.mxu0 0.0
    %288 = vmatprep.subr.mxu0 0.0
    %289 = vmatpush2.msra.mxu0 0.0
    %290 = vmatprep.subr.mxu0 0.0
    %291 = vmatpush2.msra.mxu0 0.0
    %292 = vmatprep.subr.mxu0 0.0
    %293 = vmatpush2.msra.mxu0 0.0
    %294 = vmatprep.mubr.f32.mxu0 0.0
    %295 = vmatmul.mubr.f32.gmra.mxu0 %v204
    %v296 = vpop.f32.mrf.mxu0
    %v297 = vadd.f32 %v228, %v296
    %v298 = vpop.f32.mrf.mxu0
    %299 = vdwg.mxu0
    %v300 = vld [vmem:[#allocation8] sm:$0xff]
    %v301 = vld [vmem:[#allocation8 + $0x8] sm:$0xff]
    %v302 = vld [vmem:[#allocation8 + $0x10] sm:$0xff]
    %v303 = vld [vmem:[#allocation8 + $0x18] sm:$0xff]
    %v304 = vld [vmem:[#allocation8 + $0x20] sm:$0xff]
    %v305 = vld [vmem:[#allocation8 + $0x28] sm:$0xff]
    %v306 = vld [vmem:[#allocation8 + $0x30] sm:$0xff]
    %v307 = vld [vmem:[#allocation8 + $0x38] sm:$0xff]
    %v308 = vld [vmem:[#allocation8 + $0x40] sm:$0xff]
    %v309 = vld [vmem:[#allocation8 + $0x48] sm:$0xff]
    %v310 = vld [vmem:[#allocation8 + $0x50] sm:$0xff]
    %v311 = vld [vmem:[#allocation8 + $0x58] sm:$0xff]
    %v312 = vld [vmem:[#allocation8 + $0x60] sm:$0xff]
    %v313 = vld [vmem:[#allocation8 + $0x68] sm:$0xff]
    %v314 = vld [vmem:[#allocation8 + $0x70] sm:$0xff]
    %v315 = vld [vmem:[#allocation8 + $0x78] sm:$0xff]
    %v316 = vld [vmem:[%s6] sm:$0x1]
    %v318 = vlaneseq
    %v319 = vshrl.u32 %v318, 7
    %v320 = vsub.s32 0, %v319
    %v321 = vrot.slane %v316, %v320
    %323 = vmatprep.subr.mxu0 0.0
    %324 = vmatpush1.msra.mxu0 %v315
    %325 = vmatprep.subr.mxu0 0.0
    %326 = vmatpush1.msra.mxu0 %v314
    %327 = vmatprep.subr.mxu0 0.0
    %328 = vmatpush1.msra.mxu0 %v313
    %329 = vmatprep.subr.mxu0 0.0
    %330 = vmatpush1.msra.mxu0 %v312
    %331 = vmatprep.subr.mxu0 0.0
    %332 = vmatpush1.msra.mxu0 %v311
    %333 = vmatprep.subr.mxu0 0.0
    %334 = vmatpush1.msra.mxu0 %v310
    %335 = vmatprep.subr.mxu0 0.0
    %336 = vmatpush1.msra.mxu0 %v309
    %337 = vmatprep.subr.mxu0 0.0
    %338 = vmatpush1.msra.mxu0 %v308
    %339 = vmatprep.subr.mxu0 0.0
    %340 = vmatpush1.msra.mxu0 %v307
    %341 = vmatprep.subr.mxu0 0.0
    %342 = vmatpush1.msra.mxu0 %v306
    %343 = vmatprep.subr.mxu0 0.0
    %344 = vmatpush1.msra.mxu0 %v305
    %345 = vmatprep.subr.mxu0 0.0
    %346 = vmatpush1.msra.mxu0 %v304
    %347 = vmatprep.subr.mxu0 0.0
    %348 = vmatpush1.msra.mxu0 %v303
    %349 = vmatprep.subr.mxu0 0.0
    %350 = vmatpush1.msra.mxu0 %v302
    %351 = vmatprep.subr.mxu0 0.0
    %352 = vmatpush1.msra.mxu0 %v301
    %353 = vmatprep.subr.mxu0 0.0
    %354 = vmatpush1.msra.mxu0 %v300
    %355 = vmatprep.subr.mxu0 0.0
    %356 = vmatpush2.msra.mxu0 0.0
    %357 = vmatprep.subr.mxu0 0.0
    %358 = vmatpush2.msra.mxu0 0.0
    %359 = vmatprep.subr.mxu0 0.0
    %360 = vmatpush2.msra.mxu0 0.0
    %361 = vmatprep.subr.mxu0 0.0
    %362 = vmatpush2.msra.mxu0 0.0
    %363 = vmatprep.subr.mxu0 0.0
    %364 = vmatpush2.msra.mxu0 0.0
    %365 = vmatprep.subr.mxu0 0.0
    %366 = vmatpush2.msra.mxu0 0.0
    %367 = vmatprep.subr.mxu0 0.0
    %368 = vmatpush2.msra.mxu0 0.0
    %369 = vmatprep.subr.mxu0 0.0
    %370 = vmatpush2.msra.mxu0 0.0
    %371 = vmatprep.subr.mxu0 0.0
    %372 = vmatpush2.msra.mxu0 0.0
    %373 = vmatprep.subr.mxu0 0.0
    %374 = vmatpush2.msra.mxu0 0.0
    %375 = vmatprep.subr.mxu0 0.0
    %376 = vmatpush2.msra.mxu0 0.0
    %377 = vmatprep.subr.mxu0 0.0
    %378 = vmatpush2.msra.mxu0 0.0
    %379 = vmatprep.subr.mxu0 0.0
    %380 = vmatpush2.msra.mxu0 0.0
    %381 = vmatprep.subr.mxu0 0.0
    %382 = vmatpush2.msra.mxu0 0.0
    %383 = vmatprep.subr.mxu0 0.0
    %384 = vmatpush2.msra.mxu0 0.0
    %385 = vmatprep.subr.mxu0 0.0
    %386 = vmatpush2.msra.mxu0 0.0
    %387 = vmatprep.mubr.f32.mxu0 0.0
    %388 = vmatmul.mubr.f32.gmra.mxu0 %v297
    %v389 = vpop.f32.mrf.mxu0
    %v390 = vadd.f32 %v321, %v389
    %v391 = vpop.f32.mrf.mxu0
    %392 = vdwg.mxu0
    %v393 = vld [vmem:[#allocation10] sm:$0xff]
    %v394 = vld [vmem:[#allocation10 + $0x8] sm:$0xff]
    %v395 = vld [vmem:[#allocation10 + $0x10] sm:$0xff]
    %v396 = vld [vmem:[#allocation10 + $0x18] sm:$0xff]
    %v397 = vld [vmem:[#allocation10 + $0x20] sm:$0xff]
    %v398 = vld [vmem:[#allocation10 + $0x28] sm:$0xff]
    %v399 = vld [vmem:[#allocation10 + $0x30] sm:$0xff]
    %v400 = vld [vmem:[#allocation10 + $0x38] sm:$0xff]
    %v401 = vld [vmem:[#allocation10 + $0x40] sm:$0xff]
    %v402 = vld [vmem:[#allocation10 + $0x48] sm:$0xff]
    %v403 = vld [vmem:[#allocation10 + $0x50] sm:$0xff]
    %v404 = vld [vmem:[#allocation10 + $0x58] sm:$0xff]
    %v405 = vld [vmem:[#allocation10 + $0x60] sm:$0xff]
    %v406 = vld [vmem:[#allocation10 + $0x68] sm:$0xff]
    %v407 = vld [vmem:[#allocation10 + $0x70] sm:$0xff]
    %v408 = vld [vmem:[#allocation10 + $0x78] sm:$0xff]
    %v409 = vld [vmem:[%s8] sm:$0x1]
    %v411 = vlaneseq
    %v412 = vshrl.u32 %v411, 7
    %v413 = vsub.s32 0, %v412
    %v414 = vrot.slane %v409, %v413
    %416 = vmatprep.subr.mxu0 0.0
    %417 = vmatpush1.msra.mxu0 %v408
    %418 = vmatprep.subr.mxu0 0.0
    %419 = vmatpush1.msra.mxu0 %v407
    %420 = vmatprep.subr.mxu0 0.0
    %421 = vmatpush1.msra.mxu0 %v406
    %422 = vmatprep.subr.mxu0 0.0
    %423 = vmatpush1.msra.mxu0 %v405
    %424 = vmatprep.subr.mxu0 0.0
    %425 = vmatpush1.msra.mxu0 %v404
    %426 = vmatprep.subr.mxu0 0.0
    %427 = vmatpush1.msra.mxu0 %v403
    %428 = vmatprep.subr.mxu0 0.0
    %429 = vmatpush1.msra.mxu0 %v402
    %430 = vmatprep.subr.mxu0 0.0
    %431 = vmatpush1.msra.mxu0 %v401
    %432 = vmatprep.subr.mxu0 0.0
    %433 = vmatpush1.msra.mxu0 %v400
    %434 = vmatprep.subr.mxu0 0.0
    %435 = vmatpush1.msra.mxu0 %v399
    %436 = vmatprep.subr.mxu0 0.0
    %437 = vmatpush1.msra.mxu0 %v398
    %438 = vmatprep.subr.mxu0 0.0
    %439 = vmatpush1.msra.mxu0 %v397
    %440 = vmatprep.subr.mxu0 0.0
    %441 = vmatpush1.msra.mxu0 %v396
    %442 = vmatprep.subr.mxu0 0.0
    %443 = vmatpush1.msra.mxu0 %v395
    %444 = vmatprep.subr.mxu0 0.0
    %445 = vmatpush1.msra.mxu0 %v394
    %446 = vmatprep.subr.mxu0 0.0
    %447 = vmatpush1.msra.mxu0 %v393
    %448 = vmatprep.subr.mxu0 0.0
    %449 = vmatpush2.msra.mxu0 0.0
    %450 = vmatprep.subr.mxu0 0.0
    %451 = vmatpush2.msra.mxu0 0.0
    %452 = vmatprep.subr.mxu0 0.0
    %453 = vmatpush2.msra.mxu0 0.0
    %454 = vmatprep.subr.mxu0 0.0
    %455 = vmatpush2.msra.mxu0 0.0
    %456 = vmatprep.subr.mxu0 0.0
    %457 = vmatpush2.msra.mxu0 0.0
    %458 = vmatprep.subr.mxu0 0.0
    %459 = vmatpush2.msra.mxu0 0.0
    %460 = vmatprep.subr.mxu0 0.0
    %461 = vmatpush2.msra.mxu0 0.0
    %462 = vmatprep.subr.mxu0 0.0
    %463 = vmatpush2.msra.mxu0 0.0
    %464 = vmatprep.subr.mxu0 0.0
    %465 = vmatpush2.msra.mxu0 0.0
    %466 = vmatprep.subr.mxu0 0.0
    %467 = vmatpush2.msra.mxu0 0.0
    %468 = vmatprep.subr.mxu0 0.0
    %469 = vmatpush2.msra.mxu0 0.0
    %470 = vmatprep.subr.mxu0 0.0
    %471 = vmatpush2.msra.mxu0 0.0
    %472 = vmatprep.subr.mxu0 0.0
    %473 = vmatpush2.msra.mxu0 0.0
    %474 = vmatprep.subr.mxu0 0.0
    %475 = vmatpush2.msra.mxu0 0.0
    %476 = vmatprep.subr.mxu0 0.0
    %477 = vmatpush2.msra.mxu0 0.0
    %478 = vmatprep.subr.mxu0 0.0
    %479 = vmatpush2.msra.mxu0 0.0
    %480 = vmatprep.mubr.f32.mxu0 0.0
    %481 = vmatmul.mubr.f32.gmra.mxu0 %v390
    %v482 = vpop.f32.mrf.mxu0
    %v483 = vadd.f32 %v414, %v482
    %v484 = vpop.f32.mrf.mxu0
    %485 = vdwg.mxu0
    %v486 = vld [vmem:[#allocation11] sm:$0xff]
    %v487 = vld [vmem:[#allocation11 + $0x8] sm:$0xff]
    %v488 = vld [vmem:[#allocation11 + $0x10] sm:$0xff]
    %v489 = vld [vmem:[#allocation11 + $0x18] sm:$0xff]
    %v490 = vld [vmem:[#allocation11 + $0x20] sm:$0xff]
    %v491 = vld [vmem:[#allocation11 + $0x28] sm:$0xff]
    %v492 = vld [vmem:[#allocation11 + $0x30] sm:$0xff]
    %v493 = vld [vmem:[#allocation11 + $0x38] sm:$0xff]
    %v494 = vld [vmem:[#allocation11 + $0x40] sm:$0xff]
    %v495 = vld [vmem:[#allocation11 + $0x48] sm:$0xff]
    %v496 = vld [vmem:[#allocation11 + $0x50] sm:$0xff]
    %v497 = vld [vmem:[#allocation11 + $0x58] sm:$0xff]
    %v498 = vld [vmem:[#allocation11 + $0x60] sm:$0xff]
    %v499 = vld [vmem:[#allocation11 + $0x68] sm:$0xff]
    %v500 = vld [vmem:[#allocation11 + $0x70] sm:$0xff]
    %v501 = vld [vmem:[#allocation11 + $0x78] sm:$0xff]
    %v502 = vld [vmem:[%s10] sm:$0x1]
    %v504 = vlaneseq
    %v505 = vshrl.u32 %v504, 7
    %v506 = vsub.s32 0, %v505
    %v507 = vrot.slane %v502, %v506
    %509 = vmatprep.subr.mxu0 0.0
    %510 = vmatpush1.msra.mxu0 %v501
    %511 = vmatprep.subr.mxu0 0.0
    %512 = vmatpush1.msra.mxu0 %v500
    %513 = vmatprep.subr.mxu0 0.0
    %514 = vmatpush1.msra.mxu0 %v499
    %515 = vmatprep.subr.mxu0 0.0
    %516 = vmatpush1.msra.mxu0 %v498
    %517 = vmatprep.subr.mxu0 0.0
    %518 = vmatpush1.msra.mxu0 %v497
    %519 = vmatprep.subr.mxu0 0.0
    %520 = vmatpush1.msra.mxu0 %v496
    %521 = vmatprep.subr.mxu0 0.0
    %522 = vmatpush1.msra.mxu0 %v495
    %523 = vmatprep.subr.mxu0 0.0
    %524 = vmatpush1.msra.mxu0 %v494
    %525 = vmatprep.subr.mxu0 0.0
    %526 = vmatpush1.msra.mxu0 %v493
    %527 = vmatprep.subr.mxu0 0.0
    %528 = vmatpush1.msra.mxu0 %v492
    %529 = vmatprep.subr.mxu0 0.0
    %530 = vmatpush1.msra.mxu0 %v491
    %531 = vmatprep.subr.mxu0 0.0
    %532 = vmatpush1.msra.mxu0 %v490
    %533 = vmatprep.subr.mxu0 0.0
    %534 = vmatpush1.msra.mxu0 %v489
    %535 = vmatprep.subr.mxu0 0.0
    %536 = vmatpush1.msra.mxu0 %v488
    %537 = vmatprep.subr.mxu0 0.0
    %538 = vmatpush1.msra.mxu0 %v487
    %539 = vmatprep.subr.mxu0 0.0
    %540 = vmatpush1.msra.mxu0 %v486
    %541 = vmatprep.subr.mxu0 0.0
    %542 = vmatpush2.msra.mxu0 0.0
    %543 = vmatprep.subr.mxu0 0.0
    %544 = vmatpush2.msra.mxu0 0.0
    %545 = vmatprep.subr.mxu0 0.0
    %546 = vmatpush2.msra.mxu0 0.0
    %547 = vmatprep.subr.mxu0 0.0
    %548 = vmatpush2.msra.mxu0 0.0
    %549 = vmatprep.subr.mxu0 0.0
    %550 = vmatpush2.msra.mxu0 0.0
    %551 = vmatprep.subr.mxu0 0.0
    %552 = vmatpush2.msra.mxu0 0.0
    %553 = vmatprep.subr.mxu0 0.0
    %554 = vmatpush2.msra.mxu0 0.0
    %555 = vmatprep.subr.mxu0 0.0
    %556 = vmatpush2.msra.mxu0 0.0
    %557 = vmatprep.subr.mxu0 0.0
    %558 = vmatpush2.msra.mxu0 0.0
    %559 = vmatprep.subr.mxu0 0.0
    %560 = vmatpush2.msra.mxu0 0.0
    %561 = vmatprep.subr.mxu0 0.0
    %562 = vmatpush2.msra.mxu0 0.0
    %563 = vmatprep.subr.mxu0 0.0
    %564 = vmatpush2.msra.mxu0 0.0
    %565 = vmatprep.subr.mxu0 0.0
    %566 = vmatpush2.msra.mxu0 0.0
    %567 = vmatprep.subr.mxu0 0.0
    %568 = vmatpush2.msra.mxu0 0.0
    %569 = vmatprep.subr.mxu0 0.0
    %570 = vmatpush2.msra.mxu0 0.0
    %571 = vmatprep.subr.mxu0 0.0
    %572 = vmatpush2.msra.mxu0 0.0
    %573 = vmatprep.mubr.f32.mxu0 0.0
    %574 = vmatmul.mubr.f32.gmra.mxu0 %v483
    %v575 = vpop.f32.mrf.mxu0
    %v576 = vadd.f32 %v507, %v575
    %v577 = vpop.f32.mrf.mxu0
    %578 = vdwg.mxu0
    %v579 = vmax.f32 %v576, 0.0
    %580 = vst [vmem:[#allocation13] sm:$0xff] %v579
    // Predicated region
    $region70: #{tpu_custom_call.1} parent=1 // pred_check
      _
    $region71: #{tpu_custom_call.1} parent=1 // pred_check_branch
      %582 = sbr.rel (0) target = $region73
    $region72: #{tpu_custom_call.1} parent=1 // pred_region
      %s584 = ssub.s32 128, 128
      %585 = vsyncadd [#allocation4], %s584
      %s587 = sshll.u32 [#allocation13], 4
      %s588 = int_to_ptr.vmem [resolvable:$true] %s587
      %590 = dma.vmem_to_hbm [thread:$0]  %s588, 128, %s11, [#allocation4]
    $region73: #{tpu_custom_call.1} parent=1 // pred_fallthru
      _
    // Predicated region
    $region74: #{tpu_custom_call.1} parent=1 // pred_check
      _
    $region75: #{tpu_custom_call.1} parent=1 // pred_check_branch
      %592 = sbr.rel (0) target = $region77
    $region76: #{tpu_custom_call.1} parent=1 // pred_region
      %593 = dma.done [#allocation4], 128
    $region77: #{tpu_custom_call.1} parent=1 // pred_fallthru
      _
    %594 = vsyncpa [#allocation3], 1
    %595 = vsyncpa [#allocation6], 1
    %596 = vsyncpa [#allocation9], 1
    %597 = vsyncpa [#allocation12], 1
    %598 = vsyncpa [#allocation4], 1

</llo_original>
